<compile_context>
chip_gen: v5e
topology: v5e:2x2
jax: 0.10.0
libtpu: 0.0.40
codegen_flags: <defaults>
</compile_context>

<pallas_src>
import functools

import jax
import jax.numpy as jnp
from jax.experimental import pallas as pl
from jax.experimental.pallas import tpu as pltpu

_LN_EPS = 1e-5            # nn.LayerNorm default
_INV_SQRT2 = 0.7071067811865476


# ----------------------------- math helpers --------------------------------
def _layernorm(x, gamma, beta):
    mu = jnp.mean(x, axis=-1, keepdims=True)
    var = jnp.mean((x - mu) ** 2, axis=-1, keepdims=True)
    return (x - mu) * jax.lax.rsqrt(var + _LN_EPS) * gamma + beta


def _erf_poly(x):
    # Abramowitz & Stegun 7.1.26 rational approximation, |err| <= 1.5e-7.
    # Built only from ops with guaranteed Mosaic lowerings (mul/add/div/exp).
    a1, a2, a3, a4, a5 = (0.254829592, -0.284496736, 1.421413741,
                          -1.453152027, 1.061405429)
    p = 0.3275911
    ax = jnp.abs(x)
    t = 1.0 / (1.0 + p * ax)
    poly = ((((a5 * t + a4) * t + a3) * t + a2) * t + a1) * t
    y = 1.0 - poly * jnp.exp(-ax * ax)
    return jnp.where(x >= 0, y, -y)


def _gelu(x):
    # exact (erf) GELU, matching torch.nn.functional.gelu default
    return 0.5 * x * (1.0 + _erf_poly(x * _INV_SQRT2))


def _bf16(x):
    return x.astype(jnp.bfloat16)


def _round_up(v, m):
    return ((v + m - 1) // m) * m


@functools.lru_cache(maxsize=None)
def _vmem_limit_bytes():
    # Raise the scoped-VMEM ceiling (default 16/32 MiB) but never past the
    # chip's physical VMEM (v7x has only 64 MiB per TensorCore).
    fallback = 64 * 1024 * 1024
    try:
        cap = getattr(pltpu.get_tpu_info(), "vmem_capacity_bytes", fallback)
    except Exception:
        cap = fallback
    return int(cap) * 85 // 100


# --------------------------- patch-embed kernel ------------------------------
def patch_embed_kernel(p_ref, w_ref, b_ref, o_ref):
    o_ref[...] = (
        jnp.dot(_bf16(p_ref[...]), w_ref[...],
                preferred_element_type=jnp.float32)
        + b_ref[...]
    )


# ----------------------------- fused mixer kernel ----------------------------
def fused_mixer_kernel(
    emb_ref, w1_ref, w2_ref, wc1_ref, wc2_ref, dvec_ref, colvec_ref,
    gf_ref, bf_ref, pool_ref, clf_w_ref, clf_b_ref,
    out_ref, act_ref,
    *, TB, N, D, S, Cc,
):
    layer = pl.program_id(1)

    # --- layer 0 of each batch tile: seed the resident activation -----------
    @pl.when(layer == 0)
    def _seed():
        act_ref[...] = emb_ref[...]

    x = act_ref[...]                                   # (TB*N, D) f32 residual

    # --- packed per-layer vectors (2 DMAs instead of 8) ----------------------
    ln1_g = dvec_ref[0:1, :D]
    ln1_b = dvec_ref[1:2, :D]
    ln2_g = dvec_ref[2:3, :D]
    ln2_b = dvec_ref[3:4, :D]
    bc2 = dvec_ref[4:5, :D]
    bc1 = dvec_ref[5:6, :Cc]
    b1c = colvec_ref[0:S, 0:1]                         # (S, 1) column bias
    b2c = colvec_ref[0:N, 1:2]                         # (N, 1) column bias

    # --- MLP1: token mixing (Conv1d k=1 over tokens) -------------------------
    # Weights act as the matmul LHS so the contraction over tokens uses the
    # activation's native (tokens, D) layout: no transposes, no concatenates.
    xln = _layernorm(x, ln1_g, ln1_b)
    for b in range(TB):                                # static unroll, TB small
        rows = slice(b * N, (b + 1) * N)
        hb = jnp.dot(w1_ref[...], _bf16(xln[rows, :]),
                     preferred_element_type=jnp.float32) + b1c      # (S, D)
        hb = _gelu(hb)                                 # dropout p=0 -> identity
        yb = jnp.dot(w2_ref[...], _bf16(hb),
                     preferred_element_type=jnp.float32) + b2c      # (N, D)
        act_ref[rows, :] = yb + x[rows, :]             # token-mix residual

    y = act_ref[...]                                   # (TB*N, D)

    # --- MLP2: channel mixing -------------------------------------------------
    yln = _layernorm(y, ln2_g, ln2_b)
    h2 = jnp.dot(_bf16(yln), wc1_ref[...],
                 preferred_element_type=jnp.float32) + bc1          # (TB*N, Cc)
    h2 = _gelu(h2)
    z = jnp.dot(_bf16(h2), wc2_ref[...],
                preferred_element_type=jnp.float32) + bc2           # (TB*N, D)
    act_ref[...] = z + y

    # --- head: last layer only --------------------------------------------------
    @pl.when(layer == pl.num_programs(1) - 1)
    def _head():
        a = _layernorm(act_ref[...], gf_ref[...], bf_ref[...])      # (TB*N, D)
        pooled = jnp.dot(pool_ref[...], a,
                         preferred_element_type=jnp.float32)        # (TB, D)
        out_ref[...] = (
            jnp.dot(_bf16(pooled), clf_w_ref[...],
                    preferred_element_type=jnp.float32)
            + clf_b_ref[...]
        )


# ------------------------------ pallas wrapper --------------------------------
def extract_patches(x, p):
    # x: (B, C, H, W) NCHW -> (B, N, C*p*p), matching Conv2d(k=p, stride=p)
    B, C, H, W = x.shape
    hp, wp = H // p, W // p
    x = x.reshape(B, C, hp, p, wp, p)
    x = x.transpose(0, 2, 4, 1, 3, 5)  # (B, hp, wp, C, p, p)
    return x.reshape(B, hp * wp, C * p * p)


@functools.partial(jax.jit, static_argnames=("patch", "samples_per_tile"))
def mlp_mixer_forward(x, params, patch, samples_per_tile=None):
    B = x.shape[0]
    patches = extract_patches(x, patch)                # (B, N, K)
    _, N, K = patches.shape
    patches2d = patches.reshape(B * N, K)

    D = params["pe_w"].shape[1]
    L, S, _ = params["w1"].shape
    Cc = params["wc1"].shape[2]
    NC = params["clf_w"].shape[1]

    # --- batch tiling: bounds VMEM on v7x and shards across TensorCores -------
    TB = B if samples_per_tile is None else samples_per_tile
    assert B % TB == 0 and (TB == B or TB % 8 == 0), "bad samples_per_tile"
    assert N % 8 == 0, "token count must be a multiple of 8 (pad tokens)"
    B_tiles = B // TB

    # --- bf16 streamed weights in HBM (halves per-layer DMA bytes) ------------
    pe_w = _bf16(params["pe_w"])
    w1, w2 = _bf16(params["w1"]), _bf16(params["w2"])
    wc1, wc2 = _bf16(params["wc1"]), _bf16(params["wc2"])

    # --- classifier: lane-dense padded output slab ----------------------------
    NC_pad = _round_up(NC, 128)
    clf_w = _bf16(jnp.pad(params["clf_w"], ((0, 0), (0, NC_pad - NC))))
    clf_b = jnp.pad(params["clf_b"], ((0, 0), (0, NC_pad - NC)))

    # --- pack the 8 tiny per-layer vectors into two arrays (fewer DMAs) -------
    Vmax = max(D, Cc)

    def padv(v):  # (L, 1, w) -> (L, 1, Vmax)
        return jnp.pad(v, ((0, 0), (0, 0), (0, Vmax - v.shape[-1])))

    dvec = jnp.concatenate(
        [padv(params["ln1_g"]), padv(params["ln1_b"]),
         padv(params["ln2_g"]), padv(params["ln2_b"]),
         padv(params["bc2"]), padv(params["bc1"]),
         jnp.zeros((L, 2, Vmax), jnp.float32)], axis=1)          # (L, 8, Vmax)

    SN8 = _round_up(max(S, N), 8)
    b1c = jnp.pad(jnp.swapaxes(params["b1"], 1, 2),
                  ((0, 0), (0, SN8 - S), (0, 0)))                # (L, SN8, 1)
    b2c = jnp.pad(jnp.swapaxes(params["b2"], 1, 2),
                  ((0, 0), (0, SN8 - N), (0, 0)))                # (L, SN8, 1)
    colvec = jnp.concatenate(
        [b1c, b2c, jnp.zeros((L, SN8, 6), jnp.float32)], axis=2)  # (L, SN8, 8)

    # --- mean pooling as a tiny resident matmul --------------------------------
    pool_w = jnp.repeat(jnp.eye(TB, dtype=jnp.float32), N, axis=1) / float(N)

    # --- patch embedding: separate small kernel (keeps raw patches out of the
    #     mixer kernel's VMEM budget) -------------------------------------------
    emb = pl.pallas_call(
        patch_embed_kernel,
        out_shape=jax.ShapeDtypeStruct((B * N, D), jnp.float32),
        grid=(1,),
        in_specs=[pl.BlockSpec((B * N, K), lambda i: (0, 0)),
                  pl.BlockSpec((K, D), lambda i: (0, 0)),
                  pl.BlockSpec((1, D), lambda i: (0, 0))],
        out_specs=pl.BlockSpec((B * N, D), lambda i: (0, 0)),
    )(patches2d, pe_w, params["pe_b"])

    # --- fused mixer stack -------------------------------------------------------
    def resident(shape):
        return pl.BlockSpec(shape, lambda bt, l: (0,) * len(shape))

    def per_layer(tail):
        return pl.BlockSpec((None,) + tail,
                            lambda bt, l: (l,) + (0,) * len(tail))

    kernel = functools.partial(fused_mixer_kernel, TB=TB, N=N, D=D, S=S, Cc=Cc)
    out = pl.pallas_call(
        kernel,
        out_shape=jax.ShapeDtypeStruct((B, NC_pad), jnp.float32),
        grid=(B_tiles, L),                       # layer axis innermost, sequential
        in_specs=[
            pl.BlockSpec((TB * N, D), lambda bt, l: (bt, 0)),  # embedded tokens
            per_layer((S, N)),                                 # token-mix fc1.w
            per_layer((N, S)),                                 # token-mix fc2.w
            per_layer((D, Cc)),                                # channel-mix fc1.w
            per_layer((Cc, D)),                                # channel-mix fc2.w
            per_layer((8, Vmax)),                              # packed row vectors
            per_layer((SN8, 8)),                               # packed column biases
            resident((1, D)), resident((1, D)),                # final LN g, b
            resident((TB, TB * N)),                            # pooling matrix
            resident((D, NC_pad)), resident((1, NC_pad)),      # classifier
        ],
        out_specs=pl.BlockSpec((TB, NC_pad), lambda bt, l: (bt, 0)),
        scratch_shapes=[pltpu.VMEM((TB * N, D), jnp.float32)],  # resident activation
        compiler_params=pltpu.CompilerParams(
            dimension_semantics=("parallel", "arbitrary"),
            vmem_limit_bytes=_vmem_limit_bytes()),
    )(emb, w1, w2, wc1, wc2, dvec, colvec,
      params["ln_g"], params["ln_b"], pool_w, clf_w, clf_b)
    return out[:, :NC]


# ------------------------------ parameter init --------------------------------
def init_params(key, C, patch, N, D, S, Cc, num_layers, num_classes):
    K = C * patch * patch
    ks = jax.random.split(key, 12)

    def w(k, shape, scale=0.05):
        return (scale * jax.random.normal(k, shape)).astype(jnp.float32)

    L = num_layers
    return {
        "pe_w": w(ks[0], (K, D)),
        "pe_b": w(ks[1], (1, D), 0.02),
        # mixer layers, stacked on a leading L axis (streamed per grid step)
        "ln1_g": jnp.ones((L, 1, D), jnp.float32),
        "ln1_b": jnp.zeros((L, 1, D), jnp.float32),
        "w1": w(ks[2], (L, S, N)),      # Conv1d fc1.weight (out=S, in=N)
        "b1": w(ks[3], (L, 1, S), 0.02),
        "w2": w(ks[4], (L, N, S)),      # Conv1d fc2.weight (out=N, in=S)
        "b2": w(ks[5], (L, 1, N), 0.02),
        "ln2_g": jnp.ones((L, 1, D), jnp.float32),
        "ln2_b": jnp.zeros((L, 1, D), jnp.float32),
        "wc1": w(ks[6], (L, D, Cc)),
        "bc1": w(ks[7], (L, 1, Cc), 0.02),
        "wc2": w(ks[8], (L, Cc, D)),
        "bc2": w(ks[9], (L, 1, D), 0.02),
        # head
        "ln_g": jnp.ones((1, D), jnp.float32),
        "ln_b": jnp.zeros((1, D), jnp.float32),
        "clf_w": w(ks[10], (D, num_classes)),
        "clf_b": w(ks[11], (1, num_classes), 0.02),
    }


# ---------------------------- pure-JAX reference ------------------------------
_HI = jax.lax.Precision.HIGHEST


def _gelu_exact(x):
    return 0.5 * x * (1.0 + jax.lax.erf(x * _INV_SQRT2))


def reference_forward(x, params, patch):
    patches = extract_patches(x, patch)                      # (B, N, K)
    out = jnp.matmul(patches, params["pe_w"], precision=_HI) + params["pe_b"]
    L = params["w1"].shape[0]
    for i in range(L):
        xln = _layernorm(out, params["ln1_g"][i], params["ln1_b"][i])
        h = jnp.einsum("sn,bnd->bsd", params["w1"][i], xln, precision=_HI) \
            + params["b1"][i].reshape(1, -1, 1)
        h = _gelu_exact(h)
        y = jnp.einsum("ns,bsd->bnd", params["w2"][i], h, precision=_HI) \
            + params["b2"][i].reshape(1, -1, 1)
        y = y + out
        yln = _layernorm(y, params["ln2_g"][i], params["ln2_b"][i])
        h2 = _gelu_exact(jnp.matmul(yln, params["wc1"][i], precision=_HI)
                         + params["bc1"][i])
        out = jnp.matmul(h2, params["wc2"][i], precision=_HI) + params["bc2"][i] + y
    xln = _layernorm(out, params["ln_g"], params["ln_b"])
    pooled = jnp.mean(xln, axis=1)
    return jnp.matmul(pooled, params["clf_w"], precision=_HI) + params["clf_b"]


# ----------------------------------- main --------------------------------------
if __name__ == "__main__":
    # small shapes: B=2, C=3, img=16, patch=4 -> N=16 tokens
    B, C, IMG, PATCH = 2, 3, 16, 4
    D, S, CC = 32, 16, 64              # hidden_size, hidden_s, hidden_c
    NUM_LAYERS, NUM_CLASSES = 2, 10
    N = (IMG // PATCH) * (IMG // PATCH)

    root = jax.random.PRNGKey(0)
    kx, kp = jax.random.split(root)
    x = jax.random.normal(kx, (B, C, IMG, IMG), jnp.float32)
    params = init_params(kp, C, PATCH, N, D, S, CC, NUM_LAYERS, NUM_CLASSES)

    logits = mlp_mixer_forward(x, params, PATCH)
    jax.block_until_ready(logits)

    ref = reference_forward(x, params, PATCH)
    assert logits.shape == (B, NUM_CLASSES)
    # kernel uses single-pass bf16-operand MXU matmuls with f32 accumulation;
    # tolerance is scaled with depth (operand-rounding error grows with L).
    tol = 2e-2 * max(1.0, NUM_LAYERS / 8.0)
    err = float(jnp.max(jnp.abs(logits - ref)))
    assert jnp.allclose(logits, ref, atol=tol, rtol=tol), f"max abs err {err}"
    print("KERNEL_OK")
</pallas_src>

<mosaic_0001>
module attributes {stable_mosaic.version = 11 : i64} {
  func.func @patch_embed_kernel(%arg0: i32, %arg1: memref<32x48xf32, #tpu.memory_space<vmem>>, %arg2: memref<48x32xbf16, #tpu.memory_space<vmem>>, %arg3: memref<1x32xf32, #tpu.memory_space<vmem>>, %arg4: memref<32x32xf32, #tpu.memory_space<vmem>>) attributes {dimension_semantics = [#tpu.dimension_semantics<arbitrary>], iteration_bounds = array<i64: 1>, scalar_prefetch = 0 : i64, scratch_operands = 0 : i64, tpu.core_type = #tpu.core_type<tc>, window_params = [{pipeline_mode = #tpu.pipeline_mode<synchronous>, transform_indices = @transform_0, window_bounds = array<i64: 32, 48>}, {pipeline_mode = #tpu.pipeline_mode<synchronous>, transform_indices = @transform_1, window_bounds = array<i64: 48, 32>}, {pipeline_mode = #tpu.pipeline_mode<synchronous>, transform_indices = @transform_2, window_bounds = array<i64: 1, 32>}, {pipeline_mode = #tpu.pipeline_mode<synchronous>, transform_indices = @transform_3, window_bounds = array<i64: 32, 32>}]} {
    %c0 = arith.constant 0 : index
    %c0_0 = arith.constant 0 : index
    %0 = vector.load %arg1[%c0, %c0_0] : memref<32x48xf32, #tpu.memory_space<vmem>>, vector<32x48xf32>
    %1 = arith.truncf %0 : vector<32x48xf32> to vector<32x48xbf16>
    %c0_1 = arith.constant 0 : index
    %c0_2 = arith.constant 0 : index
    %2 = vector.load %arg2[%c0_1, %c0_2] : memref<48x32xbf16, #tpu.memory_space<vmem>>, vector<48x32xbf16>
    %cst = arith.constant dense<0.000000e+00> : vector<32x32xf32>
    %3 = tpu.matmul %1, %2, %cst {dimension_numbers = #tpu.dot_dimension_numbers<[1], [0], [0], [1], [0, 0, 1, 1], [], []>} : vector<32x48xbf16>, vector<48x32xbf16>, vector<32x32xf32> -> vector<32x32xf32>
    %c0_3 = arith.constant 0 : index
    %c0_4 = arith.constant 0 : index
    %4 = vector.load %arg3[%c0_3, %c0_4] : memref<1x32xf32, #tpu.memory_space<vmem>>, vector<1x32xf32>
    %5 = vector.broadcast %4 : vector<1x32xf32> to vector<32x32xf32>
    %6 = arith.addf %3, %5 : vector<32x32xf32>
    %c0_5 = arith.constant 0 : index
    %c0_6 = arith.constant 0 : index
    %7 = vector.load %arg4[%c0_5, %c0_6] : memref<32x32xf32, #tpu.memory_space<vmem>>, vector<32x32xf32>
    tpu.vector_store %arg4[%c0_5, %c0_6], %6 {strides = array<i32>} : memref<32x32xf32, #tpu.memory_space<vmem>>, vector<32x32xf32>,
    return
  }
  func.func @transform_0(%arg0: i32) -> (i32, i32) {
    %c0_i32 = arith.constant 0 : i32
    %c0_i32_0 = arith.constant 0 : i32
    %c0_i32_1 = arith.constant 0 : i32
    return %c0_i32, %c0_i32_0 : i32, i32
  }
  func.func @transform_1(%arg0: i32) -> (i32, i32) {
    %c0_i32 = arith.constant 0 : i32
    %c0_i32_0 = arith.constant 0 : i32
    %c0_i32_1 = arith.constant 0 : i32
    return %c0_i32, %c0_i32_0 : i32, i32
  }
  func.func @transform_2(%arg0: i32) -> (i32, i32) {
    %c0_i32 = arith.constant 0 : i32
    %c0_i32_0 = arith.constant 0 : i32
    %c0_i32_1 = arith.constant 0 : i32
    return %c0_i32, %c0_i32_0 : i32, i32
  }
  func.func @transform_3(%arg0: i32) -> (i32, i32) {
    %c0_i32 = arith.constant 0 : i32
    %c0_i32_0 = arith.constant 0 : i32
    %c0_i32_1 = arith.constant 0 : i32
    return %c0_i32, %c0_i32_0 : i32, i32
  }
}

module attributes {stable_mosaic.version = 11 : i64} {
  func.func @fused_mixer_kernel(%arg0: i32, %arg1: i32, %arg2: memref<32x32xf32, #tpu.memory_space<vmem>>, %arg3: memref<1x16x16xbf16, #tpu.memory_space<vmem>>, %arg4: memref<1x16x16xbf16, #tpu.memory_space<vmem>>, %arg5: memref<1x32x64xbf16, #tpu.memory_space<vmem>>, %arg6: memref<1x64x32xbf16, #tpu.memory_space<vmem>>, %arg7: memref<1x8x64xf32, #tpu.memory_space<vmem>>, %arg8: memref<1x16x8xf32, #tpu.memory_space<vmem>>, %arg9: memref<1x32xf32, #tpu.memory_space<vmem>>, %arg10: memref<1x32xf32, #tpu.memory_space<vmem>>, %arg11: memref<2x32xf32, #tpu.memory_space<vmem>>, %arg12: memref<32x128xbf16, #tpu.memory_space<vmem>>, %arg13: memref<1x128xf32, #tpu.memory_space<vmem>>, %arg14: memref<2x128xf32, #tpu.memory_space<vmem>>, %arg15: memref<32x32xf32, #tpu.memory_space<vmem>>) attributes {dimension_semantics = [#tpu.dimension_semantics<parallel>, #tpu.dimension_semantics<arbitrary>], iteration_bounds = array<i64: 1, 2>, scalar_prefetch = 0 : i64, scratch_operands = 1 : i64, tpu.core_type = #tpu.core_type<tc>, window_params = [{transform_indices = @transform_0, window_bounds = array<i64: 32, 32>}, {transform_indices = @transform_1, window_bounds = array<i64: 1, 16, 16>}, {transform_indices = @transform_2, window_bounds = array<i64: 1, 16, 16>}, {transform_indices = @transform_3, window_bounds = array<i64: 1, 32, 64>}, {transform_indices = @transform_4, window_bounds = array<i64: 1, 64, 32>}, {transform_indices = @transform_5, window_bounds = array<i64: 1, 8, 64>}, {transform_indices = @transform_6, window_bounds = array<i64: 1, 16, 8>}, {pipeline_mode = #tpu.pipeline_mode<synchronous>, transform_indices = @transform_7, window_bounds = array<i64: 1, 32>}, {pipeline_mode = #tpu.pipeline_mode<synchronous>, transform_indices = @transform_8, window_bounds = array<i64: 1, 32>}, {pipeline_mode = #tpu.pipeline_mode<synchronous>, transform_indices = @transform_9, window_bounds = array<i64: 2, 32>}, {pipeline_mode = #tpu.pipeline_mode<synchronous>, transform_indices = @transform_10, window_bounds = array<i64: 32, 128>}, {pipeline_mode = #tpu.pipeline_mode<synchronous>, transform_indices = @transform_11, window_bounds = array<i64: 1, 128>}, {transform_indices = @transform_12, window_bounds = array<i64: 2, 128>}]} {
    %c0_i32 = arith.constant 0 : i32
    %0 = arith.cmpi eq, %arg1, %c0_i32 : i32
    %1 = arith.extui %0 : i1 to i32
    %c0_i32_0 = arith.constant 0 : i32
    %2 = arith.cmpi ne, %1, %c0_i32_0 : i32
    scf.if %2 {
      %c0_107 = arith.constant 0 : index
      %c0_108 = arith.constant 0 : index
      %234 = vector.load %arg2[%c0_107, %c0_108] : memref<32x32xf32, #tpu.memory_space<vmem>>, vector<32x32xf32>
      %c0_109 = arith.constant 0 : index
      %c0_110 = arith.constant 0 : index
      %235 = vector.load %arg15[%c0_109, %c0_110] : memref<32x32xf32, #tpu.memory_space<vmem>>, vector<32x32xf32>
      tpu.vector_store %arg15[%c0_109, %c0_110], %234 {strides = array<i32>} : memref<32x32xf32, #tpu.memory_space<vmem>>, vector<32x32xf32>,
    } else {
    }
    %c0 = arith.constant 0 : index
    %c0_1 = arith.constant 0 : index
    %3 = vector.load %arg15[%c0, %c0_1] : memref<32x32xf32, #tpu.memory_space<vmem>>, vector<32x32xf32>
    %c0_2 = arith.constant 0 : index
    %c0_3 = arith.constant 0 : index
    %c0_4 = arith.constant 0 : index
    %4 = vector.load %arg7[%c0_2, %c0_3, %c0_4] : memref<1x8x64xf32, #tpu.memory_space<vmem>>, vector<1x1x32xf32>
    %5 = vector.shape_cast %4 : vector<1x1x32xf32> to vector<1x32xf32>
    %c0_5 = arith.constant 0 : index
    %c1 = arith.constant 1 : index
    %c0_6 = arith.constant 0 : index
    %6 = vector.load %arg7[%c0_5, %c1, %c0_6] : memref<1x8x64xf32, #tpu.memory_space<vmem>>, vector<1x1x32xf32>
    %7 = vector.shape_cast %6 : vector<1x1x32xf32> to vector<1x32xf32>
    %c0_7 = arith.constant 0 : index
    %c2 = arith.constant 2 : index
    %c0_8 = arith.constant 0 : index
    %8 = vector.load %arg7[%c0_7, %c2, %c0_8] : memref<1x8x64xf32, #tpu.memory_space<vmem>>, vector<1x1x32xf32>
    %9 = vector.shape_cast %8 : vector<1x1x32xf32> to vector<1x32xf32>
    %c0_9 = arith.constant 0 : index
    %c3 = arith.constant 3 : index
    %c0_10 = arith.constant 0 : index
    %10 = vector.load %arg7[%c0_9, %c3, %c0_10] : memref<1x8x64xf32, #tpu.memory_space<vmem>>, vector<1x1x32xf32>
    %11 = vector.shape_cast %10 : vector<1x1x32xf32> to vector<1x32xf32>
    %c0_11 = arith.constant 0 : index
    %c4 = arith.constant 4 : index
    %c0_12 = arith.constant 0 : index
    %12 = vector.load %arg7[%c0_11, %c4, %c0_12] : memref<1x8x64xf32, #tpu.memory_space<vmem>>, vector<1x1x32xf32>
    %13 = vector.shape_cast %12 : vector<1x1x32xf32> to vector<1x32xf32>
    %c0_13 = arith.constant 0 : index
    %c5 = arith.constant 5 : index
    %c0_14 = arith.constant 0 : index
    %14 = vector.load %arg7[%c0_13, %c5, %c0_14] : memref<1x8x64xf32, #tpu.memory_space<vmem>>, vector<1x1x64xf32>
    %15 = vector.shape_cast %14 : vector<1x1x64xf32> to vector<1x64xf32>
    %c0_15 = arith.constant 0 : index
    %c0_16 = arith.constant 0 : index
    %c0_17 = arith.constant 0 : index
    %16 = vector.load %arg8[%c0_15, %c0_16, %c0_17] : memref<1x16x8xf32, #tpu.memory_space<vmem>>, vector<1x16x1xf32>
    %17 = vector.shape_cast %16 : vector<1x16x1xf32> to vector<16x1xf32>
    %c0_18 = arith.constant 0 : index
    %c0_19 = arith.constant 0 : index
    %c1_20 = arith.constant 1 : index
    %18 = vector.load %arg8[%c0_18, %c0_19, %c1_20] : memref<1x16x8xf32, #tpu.memory_space<vmem>>, vector<1x16x1xf32>
    %19 = vector.shape_cast %18 : vector<1x16x1xf32> to vector<16x1xf32>
    %cst = arith.constant dense<0.000000e+00> : vector<32xf32>
    %20 = vector.multi_reduction <add>, %3, %cst [1] : vector<32x32xf32> to vector<32xf32>
    %21 = vector.shape_cast %20 : vector<32xf32> to vector<32x1xf32>
    %cst_21 = arith.constant 3.200000e+01 : f32
    %22 = vector.broadcast %cst_21 : f32 to vector<32x1xf32>
    %23 = arith.divf %21, %22 : vector<32x1xf32>
    %24 = vector.broadcast %23 : vector<32x1xf32> to vector<32x32xf32>
    %25 = arith.subf %3, %24 : vector<32x32xf32>
    %26 = arith.mulf %25, %25 : vector<32x32xf32>
    %cst_22 = arith.constant dense<0.000000e+00> : vector<32xf32>
    %27 = vector.multi_reduction <add>, %26, %cst_22 [1] : vector<32x32xf32> to vector<32xf32>
    %28 = vector.shape_cast %27 : vector<32xf32> to vector<32x1xf32>
    %cst_23 = arith.constant 3.200000e+01 : f32
    %29 = vector.broadcast %cst_23 : f32 to vector<32x1xf32>
    %30 = arith.divf %28, %29 : vector<32x1xf32>
    %31 = vector.broadcast %23 : vector<32x1xf32> to vector<32x32xf32>
    %32 = arith.subf %3, %31 : vector<32x32xf32>
    %cst_24 = arith.constant 9.99999974E-6 : f32
    %33 = vector.broadcast %cst_24 : f32 to vector<32x1xf32>
    %34 = arith.addf %30, %33 : vector<32x1xf32>
    %35 = math.rsqrt %34 : vector<32x1xf32>
    %36 = vector.broadcast %35 : vector<32x1xf32> to vector<32x32xf32>
    %37 = arith.mulf %32, %36 : vector<32x32xf32>
    %38 = vector.broadcast %5 : vector<1x32xf32> to vector<32x32xf32>
    %39 = arith.mulf %37, %38 : vector<32x32xf32>
    %40 = vector.broadcast %7 : vector<1x32xf32> to vector<32x32xf32>
    %41 = arith.addf %39, %40 : vector<32x32xf32>
    %c0_25 = arith.constant 0 : index
    %c0_26 = arith.constant 0 : index
    %c0_27 = arith.constant 0 : index
    %42 = vector.load %arg3[%c0_25, %c0_26, %c0_27] : memref<1x16x16xbf16, #tpu.memory_space<vmem>>, vector<1x16x16xbf16>
    %43 = vector.shape_cast %42 : vector<1x16x16xbf16> to vector<16x16xbf16>
    %44 = vector.extract_strided_slice %41 {offsets = [0, 0], sizes = [16, 32], strides = [1, 1]} : vector<32x32xf32> to vector<16x32xf32>
    %45 = arith.truncf %44 : vector<16x32xf32> to vector<16x32xbf16>
    %cst_28 = arith.constant dense<0.000000e+00> : vector<16x32xf32>
    %46 = tpu.matmul %43, %45, %cst_28 {dimension_numbers = #tpu.dot_dimension_numbers<[1], [0], [0], [1], [0, 0, 1, 1], [], []>} : vector<16x16xbf16>, vector<16x32xbf16>, vector<16x32xf32> -> vector<16x32xf32>
    %47 = vector.broadcast %17 : vector<16x1xf32> to vector<16x32xf32>
    %48 = arith.addf %46, %47 : vector<16x32xf32>
    %cst_29 = arith.constant 5.000000e-01 : f32
    %49 = vector.broadcast %cst_29 : f32 to vector<16x32xf32>
    %50 = arith.mulf %49, %48 : vector<16x32xf32>
    %cst_30 = arith.constant 0.707106769 : f32
    %51 = vector.broadcast %cst_30 : f32 to vector<16x32xf32>
    %52 = arith.mulf %48, %51 : vector<16x32xf32>
    %53 = math.absf %52 : vector<16x32xf32>
    %cst_31 = arith.constant 0.327591091 : f32
    %54 = vector.broadcast %cst_31 : f32 to vector<16x32xf32>
    %55 = arith.mulf %54, %53 : vector<16x32xf32>
    %cst_32 = arith.constant 1.000000e+00 : f32
    %56 = vector.broadcast %cst_32 : f32 to vector<16x32xf32>
    %57 = arith.addf %56, %55 : vector<16x32xf32>
    %cst_33 = arith.constant 1.000000e+00 : f32
    %58 = vector.broadcast %cst_33 : f32 to vector<16x32xf32>
    %59 = arith.divf %58, %57 : vector<16x32xf32>
    %cst_34 = arith.constant 1.06140542 : f32
    %60 = vector.broadcast %cst_34 : f32 to vector<16x32xf32>
    %61 = arith.mulf %60, %59 : vector<16x32xf32>
    %cst_35 = arith.constant -1.45315206 : f32
    %62 = vector.broadcast %cst_35 : f32 to vector<16x32xf32>
    %63 = arith.addf %61, %62 : vector<16x32xf32>
    %64 = arith.mulf %63, %59 : vector<16x32xf32>
    %cst_36 = arith.constant 1.42141378 : f32
    %65 = vector.broadcast %cst_36 : f32 to vector<16x32xf32>
    %66 = arith.addf %64, %65 : vector<16x32xf32>
    %67 = arith.mulf %66, %59 : vector<16x32xf32>
    %cst_37 = arith.constant -0.284496725 : f32
    %68 = vector.broadcast %cst_37 : f32 to vector<16x32xf32>
    %69 = arith.addf %67, %68 : vector<16x32xf32>
    %70 = arith.mulf %69, %59 : vector<16x32xf32>
    %cst_38 = arith.constant 0.254829586 : f32
    %71 = vector.broadcast %cst_38 : f32 to vector<16x32xf32>
    %72 = arith.addf %70, %71 : vector<16x32xf32>
    %73 = arith.mulf %72, %59 : vector<16x32xf32>
    %cst_39 = arith.constant 0.000000e+00 : f32
    %74 = vector.broadcast %cst_39 : f32 to vector<16x32xf32>
    %75 = arith.subf %74, %53 : vector<16x32xf32>
    %76 = arith.mulf %75, %53 : vector<16x32xf32>
    %77 = math.exp %76 : vector<16x32xf32>
    %78 = arith.mulf %73, %77 : vector<16x32xf32>
    %cst_40 = arith.constant 1.000000e+00 : f32
    %79 = vector.broadcast %cst_40 : f32 to vector<16x32xf32>
    %80 = arith.subf %79, %78 : vector<16x32xf32>
    %cst_41 = arith.constant 0.000000e+00 : f32
    %81 = vector.broadcast %cst_41 : f32 to vector<16x32xf32>
    %82 = arith.cmpf oge, %52, %81 : vector<16x32xf32>
    %cst_42 = arith.constant 0.000000e+00 : f32
    %83 = vector.broadcast %cst_42 : f32 to vector<16x32xf32>
    %84 = arith.subf %83, %80 : vector<16x32xf32>
    %85 = arith.select %82, %80, %84 : vector<16x32xi1>, vector<16x32xf32>
    %cst_43 = arith.constant 1.000000e+00 : f32
    %86 = vector.broadcast %cst_43 : f32 to vector<16x32xf32>
    %87 = arith.addf %86, %85 : vector<16x32xf32>
    %88 = arith.mulf %50, %87 : vector<16x32xf32>
    %c0_44 = arith.constant 0 : index
    %c0_45 = arith.constant 0 : index
    %c0_46 = arith.constant 0 : index
    %89 = vector.load %arg4[%c0_44, %c0_45, %c0_46] : memref<1x16x16xbf16, #tpu.memory_space<vmem>>, vector<1x16x16xbf16>
    %90 = vector.shape_cast %89 : vector<1x16x16xbf16> to vector<16x16xbf16>
    %91 = arith.truncf %88 : vector<16x32xf32> to vector<16x32xbf16>
    %cst_47 = arith.constant dense<0.000000e+00> : vector<16x32xf32>
    %92 = tpu.matmul %90, %91, %cst_47 {dimension_numbers = #tpu.dot_dimension_numbers<[1], [0], [0], [1], [0, 0, 1, 1], [], []>} : vector<16x16xbf16>, vector<16x32xbf16>, vector<16x32xf32> -> vector<16x32xf32>
    %93 = vector.broadcast %19 : vector<16x1xf32> to vector<16x32xf32>
    %94 = arith.addf %92, %93 : vector<16x32xf32>
    %95 = vector.extract_strided_slice %3 {offsets = [0, 0], sizes = [16, 32], strides = [1, 1]} : vector<32x32xf32> to vector<16x32xf32>
    %96 = arith.addf %94, %95 : vector<16x32xf32>
    %c0_48 = arith.constant 0 : index
    %c0_49 = arith.constant 0 : index
    %97 = vector.load %arg15[%c0_48, %c0_49] : memref<32x32xf32, #tpu.memory_space<vmem>>, vector<16x32xf32>
    tpu.vector_store %arg15[%c0_48, %c0_49], %96 {strides = array<i32>} : memref<32x32xf32, #tpu.memory_space<vmem>>, vector<16x32xf32>,
    %c0_50 = arith.constant 0 : index
    %c0_51 = arith.constant 0 : index
    %c0_52 = arith.constant 0 : index
    %98 = vector.load %arg3[%c0_50, %c0_51, %c0_52] : memref<1x16x16xbf16, #tpu.memory_space<vmem>>, vector<1x16x16xbf16>
    %99 = vector.shape_cast %98 : vector<1x16x16xbf16> to vector<16x16xbf16>
    %100 = vector.extract_strided_slice %41 {offsets = [16, 0], sizes = [16, 32], strides = [1, 1]} : vector<32x32xf32> to vector<16x32xf32>
    %101 = arith.truncf %100 : vector<16x32xf32> to vector<16x32xbf16>
    %cst_53 = arith.constant dense<0.000000e+00> : vector<16x32xf32>
    %102 = tpu.matmul %99, %101, %cst_53 {dimension_numbers = #tpu.dot_dimension_numbers<[1], [0], [0], [1], [0, 0, 1, 1], [], []>} : vector<16x16xbf16>, vector<16x32xbf16>, vector<16x32xf32> -> vector<16x32xf32>
    %103 = vector.broadcast %17 : vector<16x1xf32> to vector<16x32xf32>
    %104 = arith.addf %102, %103 : vector<16x32xf32>
    %cst_54 = arith.constant 5.000000e-01 : f32
    %105 = vector.broadcast %cst_54 : f32 to vector<16x32xf32>
    %106 = arith.mulf %105, %104 : vector<16x32xf32>
    %cst_55 = arith.constant 0.707106769 : f32
    %107 = vector.broadcast %cst_55 : f32 to vector<16x32xf32>
    %108 = arith.mulf %104, %107 : vector<16x32xf32>
    %109 = math.absf %108 : vector<16x32xf32>
    %cst_56 = arith.constant 0.327591091 : f32
    %110 = vector.broadcast %cst_56 : f32 to vector<16x32xf32>
    %111 = arith.mulf %110, %109 : vector<16x32xf32>
    %cst_57 = arith.constant 1.000000e+00 : f32
    %112 = vector.broadcast %cst_57 : f32 to vector<16x32xf32>
    %113 = arith.addf %112, %111 : vector<16x32xf32>
    %cst_58 = arith.constant 1.000000e+00 : f32
    %114 = vector.broadcast %cst_58 : f32 to vector<16x32xf32>
    %115 = arith.divf %114, %113 : vector<16x32xf32>
    %cst_59 = arith.constant 1.06140542 : f32
    %116 = vector.broadcast %cst_59 : f32 to vector<16x32xf32>
    %117 = arith.mulf %116, %115 : vector<16x32xf32>
    %cst_60 = arith.constant -1.45315206 : f32
    %118 = vector.broadcast %cst_60 : f32 to vector<16x32xf32>
    %119 = arith.addf %117, %118 : vector<16x32xf32>
    %120 = arith.mulf %119, %115 : vector<16x32xf32>
    %cst_61 = arith.constant 1.42141378 : f32
    %121 = vector.broadcast %cst_61 : f32 to vector<16x32xf32>
    %122 = arith.addf %120, %121 : vector<16x32xf32>
    %123 = arith.mulf %122, %115 : vector<16x32xf32>
    %cst_62 = arith.constant -0.284496725 : f32
    %124 = vector.broadcast %cst_62 : f32 to vector<16x32xf32>
    %125 = arith.addf %123, %124 : vector<16x32xf32>
    %126 = arith.mulf %125, %115 : vector<16x32xf32>
    %cst_63 = arith.constant 0.254829586 : f32
    %127 = vector.broadcast %cst_63 : f32 to vector<16x32xf32>
    %128 = arith.addf %126, %127 : vector<16x32xf32>
    %129 = arith.mulf %128, %115 : vector<16x32xf32>
    %cst_64 = arith.constant 0.000000e+00 : f32
    %130 = vector.broadcast %cst_64 : f32 to vector<16x32xf32>
    %131 = arith.subf %130, %109 : vector<16x32xf32>
    %132 = arith.mulf %131, %109 : vector<16x32xf32>
    %133 = math.exp %132 : vector<16x32xf32>
    %134 = arith.mulf %129, %133 : vector<16x32xf32>
    %cst_65 = arith.constant 1.000000e+00 : f32
    %135 = vector.broadcast %cst_65 : f32 to vector<16x32xf32>
    %136 = arith.subf %135, %134 : vector<16x32xf32>
    %cst_66 = arith.constant 0.000000e+00 : f32
    %137 = vector.broadcast %cst_66 : f32 to vector<16x32xf32>
    %138 = arith.cmpf oge, %108, %137 : vector<16x32xf32>
    %cst_67 = arith.constant 0.000000e+00 : f32
    %139 = vector.broadcast %cst_67 : f32 to vector<16x32xf32>
    %140 = arith.subf %139, %136 : vector<16x32xf32>
    %141 = arith.select %138, %136, %140 : vector<16x32xi1>, vector<16x32xf32>
    %cst_68 = arith.constant 1.000000e+00 : f32
    %142 = vector.broadcast %cst_68 : f32 to vector<16x32xf32>
    %143 = arith.addf %142, %141 : vector<16x32xf32>
    %144 = arith.mulf %106, %143 : vector<16x32xf32>
    %c0_69 = arith.constant 0 : index
    %c0_70 = arith.constant 0 : index
    %c0_71 = arith.constant 0 : index
    %145 = vector.load %arg4[%c0_69, %c0_70, %c0_71] : memref<1x16x16xbf16, #tpu.memory_space<vmem>>, vector<1x16x16xbf16>
    %146 = vector.shape_cast %145 : vector<1x16x16xbf16> to vector<16x16xbf16>
    %147 = arith.truncf %144 : vector<16x32xf32> to vector<16x32xbf16>
    %cst_72 = arith.constant dense<0.000000e+00> : vector<16x32xf32>
    %148 = tpu.matmul %146, %147, %cst_72 {dimension_numbers = #tpu.dot_dimension_numbers<[1], [0], [0], [1], [0, 0, 1, 1], [], []>} : vector<16x16xbf16>, vector<16x32xbf16>, vector<16x32xf32> -> vector<16x32xf32>
    %149 = vector.broadcast %19 : vector<16x1xf32> to vector<16x32xf32>
    %150 = arith.addf %148, %149 : vector<16x32xf32>
    %151 = vector.extract_strided_slice %3 {offsets = [16, 0], sizes = [16, 32], strides = [1, 1]} : vector<32x32xf32> to vector<16x32xf32>
    %152 = arith.addf %150, %151 : vector<16x32xf32>
    %c16 = arith.constant 16 : index
    %c0_73 = arith.constant 0 : index
    %153 = vector.load %arg15[%c16, %c0_73] : memref<32x32xf32, #tpu.memory_space<vmem>>, vector<16x32xf32>
    tpu.vector_store %arg15[%c16, %c0_73], %152 {strides = array<i32>} : memref<32x32xf32, #tpu.memory_space<vmem>>, vector<16x32xf32>,
    %c0_74 = arith.constant 0 : index
    %c0_75 = arith.constant 0 : index
    %154 = vector.load %arg15[%c0_74, %c0_75] : memref<32x32xf32, #tpu.memory_space<vmem>>, vector<32x32xf32>
    %cst_76 = arith.constant dense<0.000000e+00> : vector<32xf32>
    %155 = vector.multi_reduction <add>, %154, %cst_76 [1] : vector<32x32xf32> to vector<32xf32>
    %156 = vector.shape_cast %155 : vector<32xf32> to vector<32x1xf32>
    %cst_77 = arith.constant 3.200000e+01 : f32
    %157 = vector.broadcast %cst_77 : f32 to vector<32x1xf32>
    %158 = arith.divf %156, %157 : vector<32x1xf32>
    %159 = vector.broadcast %158 : vector<32x1xf32> to vector<32x32xf32>
    %160 = arith.subf %154, %159 : vector<32x32xf32>
    %161 = arith.mulf %160, %160 : vector<32x32xf32>
    %cst_78 = arith.constant dense<0.000000e+00> : vector<32xf32>
    %162 = vector.multi_reduction <add>, %161, %cst_78 [1] : vector<32x32xf32> to vector<32xf32>
    %163 = vector.shape_cast %162 : vector<32xf32> to vector<32x1xf32>
    %cst_79 = arith.constant 3.200000e+01 : f32
    %164 = vector.broadcast %cst_79 : f32 to vector<32x1xf32>
    %165 = arith.divf %163, %164 : vector<32x1xf32>
    %166 = vector.broadcast %158 : vector<32x1xf32> to vector<32x32xf32>
    %167 = arith.subf %154, %166 : vector<32x32xf32>
    %cst_80 = arith.constant 9.99999974E-6 : f32
    %168 = vector.broadcast %cst_80 : f32 to vector<32x1xf32>
    %169 = arith.addf %165, %168 : vector<32x1xf32>
    %170 = math.rsqrt %169 : vector<32x1xf32>
    %171 = vector.broadcast %170 : vector<32x1xf32> to vector<32x32xf32>
    %172 = arith.mulf %167, %171 : vector<32x32xf32>
    %173 = vector.broadcast %9 : vector<1x32xf32> to vector<32x32xf32>
    %174 = arith.mulf %172, %173 : vector<32x32xf32>
    %175 = vector.broadcast %11 : vector<1x32xf32> to vector<32x32xf32>
    %176 = arith.addf %174, %175 : vector<32x32xf32>
    %177 = arith.truncf %176 : vector<32x32xf32> to vector<32x32xbf16>
    %c0_81 = arith.constant 0 : index
    %c0_82 = arith.constant 0 : index
    %c0_83 = arith.constant 0 : index
    %178 = vector.load %arg5[%c0_81, %c0_82, %c0_83] : memref<1x32x64xbf16, #tpu.memory_space<vmem>>, vector<1x32x64xbf16>
    %179 = vector.shape_cast %178 : vector<1x32x64xbf16> to vector<32x64xbf16>
    %cst_84 = arith.constant dense<0.000000e+00> : vector<32x64xf32>
    %180 = tpu.matmul %177, %179, %cst_84 {dimension_numbers = #tpu.dot_dimension_numbers<[1], [0], [0], [1], [0, 0, 1, 1], [], []>} : vector<32x32xbf16>, vector<32x64xbf16>, vector<32x64xf32> -> vector<32x64xf32>
    %181 = vector.broadcast %15 : vector<1x64xf32> to vector<32x64xf32>
    %182 = arith.addf %180, %181 : vector<32x64xf32>
    %cst_85 = arith.constant 5.000000e-01 : f32
    %183 = vector.broadcast %cst_85 : f32 to vector<32x64xf32>
    %184 = arith.mulf %183, %182 : vector<32x64xf32>
    %cst_86 = arith.constant 0.707106769 : f32
    %185 = vector.broadcast %cst_86 : f32 to vector<32x64xf32>
    %186 = arith.mulf %182, %185 : vector<32x64xf32>
    %187 = math.absf %186 : vector<32x64xf32>
    %cst_87 = arith.constant 0.327591091 : f32
    %188 = vector.broadcast %cst_87 : f32 to vector<32x64xf32>
    %189 = arith.mulf %188, %187 : vector<32x64xf32>
    %cst_88 = arith.constant 1.000000e+00 : f32
    %190 = vector.broadcast %cst_88 : f32 to vector<32x64xf32>
    %191 = arith.addf %190, %189 : vector<32x64xf32>
    %cst_89 = arith.constant 1.000000e+00 : f32
    %192 = vector.broadcast %cst_89 : f32 to vector<32x64xf32>
    %193 = arith.divf %192, %191 : vector<32x64xf32>
    %cst_90 = arith.constant 1.06140542 : f32
    %194 = vector.broadcast %cst_90 : f32 to vector<32x64xf32>
    %195 = arith.mulf %194, %193 : vector<32x64xf32>
    %cst_91 = arith.constant -1.45315206 : f32
    %196 = vector.broadcast %cst_91 : f32 to vector<32x64xf32>
    %197 = arith.addf %195, %196 : vector<32x64xf32>
    %198 = arith.mulf %197, %193 : vector<32x64xf32>
    %cst_92 = arith.constant 1.42141378 : f32
    %199 = vector.broadcast %cst_92 : f32 to vector<32x64xf32>
    %200 = arith.addf %198, %199 : vector<32x64xf32>
    %201 = arith.mulf %200, %193 : vector<32x64xf32>
    %cst_93 = arith.constant -0.284496725 : f32
    %202 = vector.broadcast %cst_93 : f32 to vector<32x64xf32>
    %203 = arith.addf %201, %202 : vector<32x64xf32>
    %204 = arith.mulf %203, %193 : vector<32x64xf32>
    %cst_94 = arith.constant 0.254829586 : f32
    %205 = vector.broadcast %cst_94 : f32 to vector<32x64xf32>
    %206 = arith.addf %204, %205 : vector<32x64xf32>
    %207 = arith.mulf %206, %193 : vector<32x64xf32>
    %cst_95 = arith.constant 0.000000e+00 : f32
    %208 = vector.broadcast %cst_95 : f32 to vector<32x64xf32>
    %209 = arith.subf %208, %187 : vector<32x64xf32>
    %210 = arith.mulf %209, %187 : vector<32x64xf32>
    %211 = math.exp %210 : vector<32x64xf32>
    %212 = arith.mulf %207, %211 : vector<32x64xf32>
    %cst_96 = arith.constant 1.000000e+00 : f32
    %213 = vector.broadcast %cst_96 : f32 to vector<32x64xf32>
    %214 = arith.subf %213, %212 : vector<32x64xf32>
    %cst_97 = arith.constant 0.000000e+00 : f32
    %215 = vector.broadcast %cst_97 : f32 to vector<32x64xf32>
    %216 = arith.cmpf oge, %186, %215 : vector<32x64xf32>
    %cst_98 = arith.constant 0.000000e+00 : f32
    %217 = vector.broadcast %cst_98 : f32 to vector<32x64xf32>
    %218 = arith.subf %217, %214 : vector<32x64xf32>
    %219 = arith.select %216, %214, %218 : vector<32x64xi1>, vector<32x64xf32>
    %cst_99 = arith.constant 1.000000e+00 : f32
    %220 = vector.broadcast %cst_99 : f32 to vector<32x64xf32>
    %221 = arith.addf %220, %219 : vector<32x64xf32>
    %222 = arith.mulf %184, %221 : vector<32x64xf32>
    %223 = arith.truncf %222 : vector<32x64xf32> to vector<32x64xbf16>
    %c0_100 = arith.constant 0 : index
    %c0_101 = arith.constant 0 : index
    %c0_102 = arith.constant 0 : index
    %224 = vector.load %arg6[%c0_100, %c0_101, %c0_102] : memref<1x64x32xbf16, #tpu.memory_space<vmem>>, vector<1x64x32xbf16>
    %225 = vector.shape_cast %224 : vector<1x64x32xbf16> to vector<64x32xbf16>
    %cst_103 = arith.constant dense<0.000000e+00> : vector<32x32xf32>
    %226 = tpu.matmul %223, %225, %cst_103 {dimension_numbers = #tpu.dot_dimension_numbers<[1], [0], [0], [1], [0, 0, 1, 1], [], []>} : vector<32x64xbf16>, vector<64x32xbf16>, vector<32x32xf32> -> vector<32x32xf32>
    %227 = vector.broadcast %13 : vector<1x32xf32> to vector<32x32xf32>
    %228 = arith.addf %226, %227 : vector<32x32xf32>
    %229 = arith.addf %228, %154 : vector<32x32xf32>
    %c0_104 = arith.constant 0 : index
    %c0_105 = arith.constant 0 : index
    %230 = vector.load %arg15[%c0_104, %c0_105] : memref<32x32xf32, #tpu.memory_space<vmem>>, vector<32x32xf32>
    tpu.vector_store %arg15[%c0_104, %c0_105], %229 {strides = array<i32>} : memref<32x32xf32, #tpu.memory_space<vmem>>, vector<32x32xf32>,
    %c1_i32 = arith.constant 1 : i32
    %231 = arith.cmpi eq, %arg1, %c1_i32 : i32
    %232 = arith.extui %231 : i1 to i32
    %c0_i32_106 = arith.constant 0 : i32
    %233 = arith.cmpi ne, %232, %c0_i32_106 : i32
    scf.if %233 {
      %c0_107 = arith.constant 0 : index
      %c0_108 = arith.constant 0 : index
      %234 = vector.load %arg15[%c0_107, %c0_108] : memref<32x32xf32, #tpu.memory_space<vmem>>, vector<32x32xf32>
      %c0_109 = arith.constant 0 : index
      %c0_110 = arith.constant 0 : index
      %235 = vector.load %arg9[%c0_109, %c0_110] : memref<1x32xf32, #tpu.memory_space<vmem>>, vector<1x32xf32>
      %c0_111 = arith.constant 0 : index
      %c0_112 = arith.constant 0 : index
      %236 = vector.load %arg10[%c0_111, %c0_112] : memref<1x32xf32, #tpu.memory_space<vmem>>, vector<1x32xf32>
      %cst_113 = arith.constant dense<0.000000e+00> : vector<32xf32>
      %237 = vector.multi_reduction <add>, %234, %cst_113 [1] : vector<32x32xf32> to vector<32xf32>
      %238 = vector.shape_cast %237 : vector<32xf32> to vector<32x1xf32>
      %cst_114 = arith.constant 3.200000e+01 : f32
      %239 = vector.broadcast %cst_114 : f32 to vector<32x1xf32>
      %240 = arith.divf %238, %239 : vector<32x1xf32>
      %241 = vector.broadcast %240 : vector<32x1xf32> to vector<32x32xf32>
      %242 = arith.subf %234, %241 : vector<32x32xf32>
      %243 = arith.mulf %242, %242 : vector<32x32xf32>
      %cst_115 = arith.constant dense<0.000000e+00> : vector<32xf32>
      %244 = vector.multi_reduction <add>, %243, %cst_115 [1] : vector<32x32xf32> to vector<32xf32>
      %245 = vector.shape_cast %244 : vector<32xf32> to vector<32x1xf32>
      %cst_116 = arith.constant 3.200000e+01 : f32
      %246 = vector.broadcast %cst_116 : f32 to vector<32x1xf32>
      %247 = arith.divf %245, %246 : vector<32x1xf32>
      %248 = vector.broadcast %240 : vector<32x1xf32> to vector<32x32xf32>
      %249 = arith.subf %234, %248 : vector<32x32xf32>
      %cst_117 = arith.constant 9.99999974E-6 : f32
      %250 = vector.broadcast %cst_117 : f32 to vector<32x1xf32>
      %251 = arith.addf %247, %250 : vector<32x1xf32>
      %252 = math.rsqrt %251 : vector<32x1xf32>
      %253 = vector.broadcast %252 : vector<32x1xf32> to vector<32x32xf32>
      %254 = arith.mulf %249, %253 : vector<32x32xf32>
      %255 = vector.broadcast %235 : vector<1x32xf32> to vector<32x32xf32>
      %256 = arith.mulf %254, %255 : vector<32x32xf32>
      %257 = vector.broadcast %236 : vector<1x32xf32> to vector<32x32xf32>
      %258 = arith.addf %256, %257 : vector<32x32xf32>
      %c0_118 = arith.constant 0 : index
      %c0_119 = arith.constant 0 : index
      %259 = vector.load %arg11[%c0_118, %c0_119] : memref<2x32xf32, #tpu.memory_space<vmem>>, vector<2x32xf32>
      %cst_120 = arith.constant dense<0.000000e+00> : vector<2x32xf32>
      %260 = tpu.matmul %259, %258, %cst_120 {dimension_numbers = #tpu.dot_dimension_numbers<[1], [0], [0], [1], [0, 0, 1, 1], [], []>} : vector<2x32xf32>, vector<32x32xf32>, vector<2x32xf32> -> vector<2x32xf32>
      %261 = arith.truncf %260 : vector<2x32xf32> to vector<2x32xbf16>
      %c0_121 = arith.constant 0 : index
      %c0_122 = arith.constant 0 : index
      %262 = vector.load %arg12[%c0_121, %c0_122] : memref<32x128xbf16, #tpu.memory_space<vmem>>, vector<32x128xbf16>
      %cst_123 = arith.constant dense<0.000000e+00> : vector<2x128xf32>
      %263 = tpu.matmul %261, %262, %cst_123 {dimension_numbers = #tpu.dot_dimension_numbers<[1], [0], [0], [1], [0, 0, 1, 1], [], []>} : vector<2x32xbf16>, vector<32x128xbf16>, vector<2x128xf32> -> vector<2x128xf32>
      %c0_124 = arith.constant 0 : index
      %c0_125 = arith.constant 0 : index
      %264 = vector.load %arg13[%c0_124, %c0_125] : memref<1x128xf32, #tpu.memory_space<vmem>>, vector<1x128xf32>
      %265 = vector.broadcast %264 : vector<1x128xf32> to vector<2x128xf32>
      %266 = arith.addf %263, %265 : vector<2x128xf32>
      %c0_126 = arith.constant 0 : index
      %c0_127 = arith.constant 0 : index
      %267 = vector.load %arg14[%c0_126, %c0_127] : memref<2x128xf32, #tpu.memory_space<vmem>>, vector<2x128xf32>
      tpu.vector_store %arg14[%c0_126, %c0_127], %266 {strides = array<i32>} : memref<2x128xf32, #tpu.memory_space<vmem>>, vector<2x128xf32>,
    } else {
    }
    return
  }
  func.func @transform_0(%arg0: i32, %arg1: i32) -> (i32, i32) {
    %c0_i32 = arith.constant 0 : i32
    %c0_i32_0 = arith.constant 0 : i32
    return %arg0, %c0_i32 : i32, i32
  }
  func.func @transform_1(%arg0: i32, %arg1: i32) -> (i32, i32, i32) {
    %c0_i32 = arith.constant 0 : i32
    %c0_i32_0 = arith.constant 0 : i32
    %c0_i32_1 = arith.constant 0 : i32
    return %arg1, %c0_i32, %c0_i32_0 : i32, i32, i32
  }
  func.func @transform_2(%arg0: i32, %arg1: i32) -> (i32, i32, i32) {
    %c0_i32 = arith.constant 0 : i32
    %c0_i32_0 = arith.constant 0 : i32
    %c0_i32_1 = arith.constant 0 : i32
    return %arg1, %c0_i32, %c0_i32_0 : i32, i32, i32
  }
  func.func @transform_3(%arg0: i32, %arg1: i32) -> (i32, i32, i32) {
    %c0_i32 = arith.constant 0 : i32
    %c0_i32_0 = arith.constant 0 : i32
    %c0_i32_1 = arith.constant 0 : i32
    return %arg1, %c0_i32, %c0_i32_0 : i32, i32, i32
  }
  func.func @transform_4(%arg0: i32, %arg1: i32) -> (i32, i32, i32) {
    %c0_i32 = arith.constant 0 : i32
    %c0_i32_0 = arith.constant 0 : i32
    %c0_i32_1 = arith.constant 0 : i32
    return %arg1, %c0_i32, %c0_i32_0 : i32, i32, i32
  }
  func.func @transform_5(%arg0: i32, %arg1: i32) -> (i32, i32, i32) {
    %c0_i32 = arith.constant 0 : i32
    %c0_i32_0 = arith.constant 0 : i32
    %c0_i32_1 = arith.constant 0 : i32
    return %arg1, %c0_i32, %c0_i32_0 : i32, i32, i32
  }
  func.func @transform_6(%arg0: i32, %arg1: i32) -> (i32, i32, i32) {
    %c0_i32 = arith.constant 0 : i32
    %c0_i32_0 = arith.constant 0 : i32
    %c0_i32_1 = arith.constant 0 : i32
    return %arg1, %c0_i32, %c0_i32_0 : i32, i32, i32
  }
  func.func @transform_7(%arg0: i32, %arg1: i32) -> (i32, i32) {
    %c0_i32 = arith.constant 0 : i32
    %c0_i32_0 = arith.constant 0 : i32
    %c0_i32_1 = arith.constant 0 : i32
    return %c0_i32, %c0_i32_0 : i32, i32
  }
  func.func @transform_8(%arg0: i32, %arg1: i32) -> (i32, i32) {
    %c0_i32 = arith.constant 0 : i32
    %c0_i32_0 = arith.constant 0 : i32
    %c0_i32_1 = arith.constant 0 : i32
    return %c0_i32, %c0_i32_0 : i32, i32
  }
  func.func @transform_9(%arg0: i32, %arg1: i32) -> (i32, i32) {
    %c0_i32 = arith.constant 0 : i32
    %c0_i32_0 = arith.constant 0 : i32
    %c0_i32_1 = arith.constant 0 : i32
    return %c0_i32, %c0_i32_0 : i32, i32
  }
  func.func @transform_10(%arg0: i32, %arg1: i32) -> (i32, i32) {
    %c0_i32 = arith.constant 0 : i32
    %c0_i32_0 = arith.constant 0 : i32
    %c0_i32_1 = arith.constant 0 : i32
    return %c0_i32, %c0_i32_0 : i32, i32
  }
  func.func @transform_11(%arg0: i32, %arg1: i32) -> (i32, i32) {
    %c0_i32 = arith.constant 0 : i32
    %c0_i32_0 = arith.constant 0 : i32
    %c0_i32_1 = arith.constant 0 : i32
    return %c0_i32, %c0_i32_0 : i32, i32
  }
  func.func @transform_12(%arg0: i32, %arg1: i32) -> (i32, i32) {
    %c0_i32 = arith.constant 0 : i32
    %c0_i32_0 = arith.constant 0 : i32
    return %arg0, %c0_i32 : i32, i32
  }
}

</mosaic_0001>

<llo_original>
// kernel: mlp_mixer_forward.2
$region0: #{mlp_mixer_forward.2}
  #allocation0 [shape = 'u32[]', space=smem, size = 0x4, offset = 0x4, fixed_abs, tag = 'smem constant byte address 0x4 - core index']
  #allocation1 [shape = 'u32[72,128]{1,0:T(1,128)}', space=vmem, size = 0x9000, scoped, tag = 'internal scratch']
  %s0 = inlined_call_operand.vmem [shape: f32[32,48], index: 0, kind: input, shape index: {}]
  %s1 = inlined_call_operand.vmem [shape: bf16[48,32], index: 1, kind: input, shape index: {}]
  %s2 = inlined_call_operand.vmem [shape: f32[1,32], index: 2, kind: input, shape index: {}]
  %s3 = inlined_call_operand.vmem [shape: f32[32,32], index: 3, kind: output, shape index: {}]
  %s4 = sld [smem:[#allocation0]]
  $region22: #{mlp_mixer_forward.2} parent=0
    _
  %s6 = ssub.s32 1, %s4
  %s7 = scalar_select 0, %s6, %s4
  // Predicated region
  $region2: #{mlp_mixer_forward.2} parent=0 // pred_check
    _
  $region3: #{mlp_mixer_forward.2} parent=0 // pred_check_branch
    %9 = sbr.rel (0) target = $region5
  $region4: #{mlp_mixer_forward.2} parent=0 // pred_region
    _
  $region5: #{mlp_mixer_forward.2} parent=0 // pred_fallthru
    _
  // Predicated region
  $region6: #{mlp_mixer_forward.2} parent=0 // pred_check
    _
  $region7: #{mlp_mixer_forward.2} parent=0 // pred_check_branch
    %11 = sbr.rel (0) target = $region9
  $region8: #{mlp_mixer_forward.2} parent=0 // pred_region
    _
  $region9: #{mlp_mixer_forward.2} parent=0 // pred_fallthru
    _
  // Predicated region
  $region10: #{mlp_mixer_forward.2} parent=0 // pred_check
    _
  $region11: #{mlp_mixer_forward.2} parent=0 // pred_check_branch
    %13 = sbr.rel (0) target = $region13
  $region12: #{mlp_mixer_forward.2} parent=0 // pred_region
    _
  $region13: #{mlp_mixer_forward.2} parent=0 // pred_fallthru
    _
  %v15 = vld [vmem:[%s0] sm:$0xff]
  %v16 = vld [vmem:[%s0 + $0x8] sm:$0xff]
  %v17 = vld [vmem:[%s0 + $0x10] sm:$0xff]
  %v18 = vld [vmem:[%s0 + $0x18] sm:$0xff]
  %v19 = vpack.c.bf16 %v16, %v15
  %v20 = vpack.c.bf16 %v18, %v17
  %v21 = vld [vmem:[%s1] sm:$0xf]
  %v22 = vld [vmem:[%s1 + $0x4] sm:$0xf]
  %v23 = vld [vmem:[%s1 + $0x8] sm:$0xf]
  %v24 = vld [vmem:[%s1 + $0xc] sm:$0xf]
  %v25 = vld [vmem:[%s1 + $0x10] sm:$0xf]
  %v26 = vld [vmem:[%s1 + $0x14] sm:$0xf]
  %v27 = vld [vmem:[%s2] sm:$0x1]
  %v29 = vperm.slane %v27, 0
  %v37 = vunpack.c.l.b16 %v21
  %v38 = vunpack.c.l.b16 %v22
  %v39 = vunpack.c.l.b16 %v23
  %v40 = vunpack.c.l.b16 %v24
  %v41 = vunpack.c.l.b16 %v25
  %v42 = vunpack.c.l.b16 %v26
  %v43 = vpack.c.b16 %v38, %v37
  %v44 = vpack.c.b16 %v40, %v39
  %v45 = vpack.c.b16 %v42, %v41
  %vm49 = vcmask 392192
  %v51 = vsel %vm49, %v19, 0
  %v54 = vsel %vm49, %v20, 0
  %56 = vmatpush.bf16.msra.mxu0 0
  %57 = vmatpush.bf16.msra.mxu0 0
  %58 = vmatpush.bf16.msra.mxu0 0
  %59 = vmatpush.bf16.msra.mxu0 0
  %60 = vmatpush.bf16.msra.mxu0 0
  %61 = vmatpush.bf16.msra.mxu0 %v45
  %62 = vmatpush.bf16.msra.mxu0 %v44
  %63 = vmatpush.bf16.msra.mxu0 %v43
  %64 = vmatmul.bf16.gmra.mxu0 %v51
  %v65 = vpop.f32.mrf.mxu0
  %v66 = vadd.f32 %v29, %v65
  %v67 = vpop.f32.mrf.mxu0
  %v68 = vadd.f32 %v29, %v67
  %69 = vmatmul.bf16.gmra.mxu0 %v54
  %v70 = vpop.f32.mrf.mxu0
  %v71 = vadd.f32 %v29, %v70
  %v72 = vpop.f32.mrf.mxu0
  %v73 = vadd.f32 %v29, %v72
  %74 = vdwg.mxu0
  %vm75 = vcmask 261120
  %76 = vst.msk [vmem:[%s3] sm:$0xff] %vm75, %v66
  %77 = vst.msk [vmem:[%s3 + $0x8] sm:$0xff] %vm75, %v68
  %78 = vst.msk [vmem:[%s3 + $0x10] sm:$0xff] %vm75, %v71
  %79 = vst.msk [vmem:[%s3 + $0x18] sm:$0xff] %vm75, %v73
  // Predicated region
  $region14: #{mlp_mixer_forward.2} parent=0 // pred_check
    _
  $region15: #{mlp_mixer_forward.2} parent=0 // pred_check_branch
    %81 = sbr.rel (0) target = $region17
  $region16: #{mlp_mixer_forward.2} parent=0 // pred_region
    _
  $region17: #{mlp_mixer_forward.2} parent=0 // pred_fallthru
    _
  // Predicated region
  $region18: #{mlp_mixer_forward.2} parent=0 // pred_check
    _
  $region19: #{mlp_mixer_forward.2} parent=0 // pred_check_branch
    %83 = sbr.rel (0) target = $region21
  $region20: #{mlp_mixer_forward.2} parent=0 // pred_region
    _
  $region21: #{mlp_mixer_forward.2} parent=0 // pred_fallthru
    _

// kernel: mlp_mixer_forward.3
$region0: #{mlp_mixer_forward.3}
  #allocation0 [shape = 'u32[]', space=smem, size = 0x4, offset = 0x4, fixed_abs, tag = 'smem constant byte address 0x4 - core index']
  #allocation1 [shape = 'u32[72,128]{1,0:T(1,128)}', space=vmem, size = 0x9000, scoped, tag = 'internal scratch']
  #allocation2 [shape = 'f32[32,32]{1,0:T(8,128)}', space=vmem, size = 0x4000, scoped, tag = 'scratch operand']
  %s0 = inlined_call_operand.vmem [shape: f32[32,32], index: 0, kind: input, shape index: {}]
  %s1 = inlined_call_operand.vmem [shape: bf16[2,16,16], index: 1, kind: input, shape index: {}]
  %s2 = inlined_call_operand.vmem [shape: bf16[2,16,16], index: 2, kind: input, shape index: {}]
  %s3 = inlined_call_operand.vmem [shape: bf16[2,32,64], index: 3, kind: input, shape index: {}]
  %s4 = inlined_call_operand.vmem [shape: bf16[2,64,32], index: 4, kind: input, shape index: {}]
  %s5 = inlined_call_operand.vmem [shape: f32[2,8,64], index: 5, kind: input, shape index: {}]
  %s6 = inlined_call_operand.vmem [shape: f32[2,16,8], index: 6, kind: input, shape index: {}]
  %s7 = inlined_call_operand.vmem [shape: f32[1,32], index: 7, kind: input, shape index: {}]
  %s8 = inlined_call_operand.vmem [shape: f32[1,32], index: 8, kind: input, shape index: {}]
  %s9 = inlined_call_operand.vmem [shape: f32[2,32], index: 9, kind: input, shape index: {}]
  %s10 = inlined_call_operand.vmem [shape: bf16[32,128], index: 10, kind: input, shape index: {}]
  %s11 = inlined_call_operand.vmem [shape: f32[1,128], index: 11, kind: input, shape index: {}]
  %s12 = inlined_call_operand.hbm [shape: f32[2,128], index: 12, kind: output, shape index: {}]
  %s13 = sld [smem:[#allocation0]]
  $region89: #{mlp_mixer_forward.3} parent=0
    _
  %s15 = ssub.s32 1, %s13
  %s16 = scalar_select 0, %s15, %s13
  $region1: #{mlp_mixer_forward.3} parent=0
    #allocation3 [shape = 'u8[1024]{0}', space=vmem, size = 0x400, scoped, tag = 'output window, operand 0, single buffered']
    #allocation4 [shape = 's32[2]{0}', space=sflag, size = 0x8, scoped, tag = 'scoped memory for mlp_mixer_forward.3']
    %17 = vsyncpa [#allocation4], 0
    loop: start=0, step=1, limit=4
    $region2: #{mlp_mixer_forward.3} parent=1 // loop_pre_header
      _
    $region3: #{mlp_mixer_forward.3} parent=1 // loop_header
      %s19 = sphi 0, %s23
      %p20 = scmp.ge.s32.totalorder %s19, 4
      %s26 = sphi 0, %s38
      %s27 = sphi 0, %s34
      %s28 = sphi 0, %s26
      %s29 = sphi 0, %s27
      %s30 = sphi 0, %s28
      %s31 = sphi 0, %s29
      %s41 = sphi 0, %s43
      %s44 = sphi 0, %s41
      %s45 = sphi 0, %s44
      %s61 = sphi 0, %s45
      %s67 = sphi 0, %s69
      %s70 = sphi 0, %s67
      %s71 = sphi 0, %s70
      %s87 = sphi 0, %s71
      %s93 = sphi 0, %s95
      %s96 = sphi 0, %s93
      %s97 = sphi 0, %s96
      %s113 = sphi 0, %s97
      %s119 = sphi 0, %s121
      %s122 = sphi 0, %s119
      %s123 = sphi 0, %s122
      %s139 = sphi 0, %s123
      %s145 = sphi 0, %s147
      %s148 = sphi 0, %s145
      %s149 = sphi 0, %s148
      %s165 = sphi 0, %s149
      %s171 = sphi 0, %s173
      %s174 = sphi 0, %s171
      %s175 = sphi 0, %s174
      %s191 = sphi 0, %s175
      %s197 = sphi 0, %s199
      %s200 = sphi 0, %s197
      %s201 = sphi 0, %s200
      %s217 = sphi 0, %s201
      %s221 = sphi 0, %s221
      %s223 = sphi 0, %s221
      %s224 = sphi 0, %s223
      %s238 = sphi 0, %s224
      %s242 = sphi 0, %s242
      %s244 = sphi 0, %s242
      %s245 = sphi 0, %s244
      %s259 = sphi 0, %s245
      %s263 = sphi 0, %s263
      %s265 = sphi 0, %s263
      %s266 = sphi 0, %s265
      %s280 = sphi 0, %s266
      %s284 = sphi 0, %s284
      %s286 = sphi 0, %s284
      %s287 = sphi 0, %s286
      %s301 = sphi 0, %s287
      %s305 = sphi 0, %s305
      %s307 = sphi 0, %s305
      %s308 = sphi 0, %s307
      %s322 = sphi 0, %s308
      %s328 = sphi 0, %s330
      %s331 = sphi 0, %s328
      %s332 = sphi 0, %s331
      %s348 = sphi 0, %s332
    $region4: #{mlp_mixer_forward.3} parent=1 // loop_header_branch
      %22 = sbr.rel (%p20) target = $region8
    $region5: #{mlp_mixer_forward.3} parent=1 // loop_body
      %s24 = ssub.s32 %s19, 1
      %s25 = ssub.s32 %s19, 2
      %s32 = sadd.s32 1, %s27
      %p33 = scmp.ge.s32.totalorder %s32, 2
      %s34 = scalar_select %p33, 0, %s32
      %s35 = sadd.s32 1, %s26
      %s36 = scalar_select %p33, %s35, %s26
      %p37 = scmp.ge.s32.totalorder %s36, 1
      %s38 = scalar_select %p37, 0, %s36
      %s39 = ssub.s32 %s26, %s38
      %p40 = scmp.eq.s32.totalorder %s39, 0
      %s42 = sadd.s32 %s41, 1
      %s43 = scalar_select %p40, %s41, %s42
      %p46 = pneg %p40
      %p47 = scmp.eq.s32.totalorder %s19, 1
      %p48 = por %p46, %p47
      %p49 = scmp.ne.s32.totalorder %s41, %s44
      %p50 = scmp.eq.s32.totalorder %s19, 0
      %p51 = por %p49, %p50
      %p52 = scmp.ne.s32.totalorder %s41, %s44
      %p53 = scmp.eq.s32.totalorder %s24, 1
      %p54 = por %p52, %p53
      %p55 = scmp.ne.s32.totalorder %s44, %s45
      %p56 = scmp.eq.s32.totalorder %s24, 0
      %p57 = por %p55, %p56
      %p58 = scmp.ne.s32.totalorder %s44, %s45
      %p59 = scmp.eq.s32.totalorder %s25, 1
      %p60 = por %p58, %p59
      %p62 = scmp.ne.s32.totalorder %s45, %s61
      %p63 = scmp.eq.s32.totalorder %s25, 0
      %p64 = por %p62, %p63
      %s65 = ssub.s32 %s27, %s34
      %p66 = scmp.eq.s32.totalorder %s65, 0
      %s68 = sadd.s32 %s67, 1
      %s69 = scalar_select %p66, %s67, %s68
      %p72 = pneg %p66
      %p73 = scmp.eq.s32.totalorder %s19, 1
      %p74 = por %p72, %p73
      %p75 = scmp.ne.s32.totalorder %s67, %s70
      %p76 = scmp.eq.s32.totalorder %s19, 0
      %p77 = por %p75, %p76
      %p78 = scmp.ne.s32.totalorder %s67, %s70
      %p79 = scmp.eq.s32.totalorder %s24, 1
      %p80 = por %p78, %p79
      %p81 = scmp.ne.s32.totalorder %s70, %s71
      %p82 = scmp.eq.s32.totalorder %s24, 0
      %p83 = por %p81, %p82
      %p84 = scmp.ne.s32.totalorder %s70, %s71
      %p85 = scmp.eq.s32.totalorder %s25, 1
      %p86 = por %p84, %p85
      %p88 = scmp.ne.s32.totalorder %s71, %s87
      %p89 = scmp.eq.s32.totalorder %s25, 0
      %p90 = por %p88, %p89
      %s91 = ssub.s32 %s27, %s34
      %p92 = scmp.eq.s32.totalorder %s91, 0
      %s94 = sadd.s32 %s93, 1
      %s95 = scalar_select %p92, %s93, %s94
      %p98 = pneg %p92
      %p99 = scmp.eq.s32.totalorder %s19, 1
      %p100 = por %p98, %p99
      %p101 = scmp.ne.s32.totalorder %s93, %s96
      %p102 = scmp.eq.s32.totalorder %s19, 0
      %p103 = por %p101, %p102
      %p104 = scmp.ne.s32.totalorder %s93, %s96
      %p105 = scmp.eq.s32.totalorder %s24, 1
      %p106 = por %p104, %p105
      %p107 = scmp.ne.s32.totalorder %s96, %s97
      %p108 = scmp.eq.s32.totalorder %s24, 0
      %p109 = por %p107, %p108
      %p110 = scmp.ne.s32.totalorder %s96, %s97
      %p111 = scmp.eq.s32.totalorder %s25, 1
      %p112 = por %p110, %p111
      %p114 = scmp.ne.s32.totalorder %s97, %s113
      %p115 = scmp.eq.s32.totalorder %s25, 0
      %p116 = por %p114, %p115
      %s117 = ssub.s32 %s27, %s34
      %p118 = scmp.eq.s32.totalorder %s117, 0
      %s120 = sadd.s32 %s119, 1
      %s121 = scalar_select %p118, %s119, %s120
      %p124 = pneg %p118
      %p125 = scmp.eq.s32.totalorder %s19, 1
      %p126 = por %p124, %p125
      %p127 = scmp.ne.s32.totalorder %s119, %s122
      %p128 = scmp.eq.s32.totalorder %s19, 0
      %p129 = por %p127, %p128
      %p130 = scmp.ne.s32.totalorder %s119, %s122
      %p131 = scmp.eq.s32.totalorder %s24, 1
      %p132 = por %p130, %p131
      %p133 = scmp.ne.s32.totalorder %s122, %s123
      %p134 = scmp.eq.s32.totalorder %s24, 0
      %p135 = por %p133, %p134
      %p136 = scmp.ne.s32.totalorder %s122, %s123
      %p137 = scmp.eq.s32.totalorder %s25, 1
      %p138 = por %p136, %p137
      %p140 = scmp.ne.s32.totalorder %s123, %s139
      %p141 = scmp.eq.s32.totalorder %s25, 0
      %p142 = por %p140, %p141
      %s143 = ssub.s32 %s27, %s34
      %p144 = scmp.eq.s32.totalorder %s143, 0
      %s146 = sadd.s32 %s145, 1
      %s147 = scalar_select %p144, %s145, %s146
      %p150 = pneg %p144
      %p151 = scmp.eq.s32.totalorder %s19, 1
      %p152 = por %p150, %p151
      %p153 = scmp.ne.s32.totalorder %s145, %s148
      %p154 = scmp.eq.s32.totalorder %s19, 0
      %p155 = por %p153, %p154
      %p156 = scmp.ne.s32.totalorder %s145, %s148
      %p157 = scmp.eq.s32.totalorder %s24, 1
      %p158 = por %p156, %p157
      %p159 = scmp.ne.s32.totalorder %s148, %s149
      %p160 = scmp.eq.s32.totalorder %s24, 0
      %p161 = por %p159, %p160
      %p162 = scmp.ne.s32.totalorder %s148, %s149
      %p163 = scmp.eq.s32.totalorder %s25, 1
      %p164 = por %p162, %p163
      %p166 = scmp.ne.s32.totalorder %s149, %s165
      %p167 = scmp.eq.s32.totalorder %s25, 0
      %p168 = por %p166, %p167
      %s169 = ssub.s32 %s27, %s34
      %p170 = scmp.eq.s32.totalorder %s169, 0
      %s172 = sadd.s32 %s171, 1
      %s173 = scalar_select %p170, %s171, %s172
      %p176 = pneg %p170
      %p177 = scmp.eq.s32.totalorder %s19, 1
      %p178 = por %p176, %p177
      %p179 = scmp.ne.s32.totalorder %s171, %s174
      %p180 = scmp.eq.s32.totalorder %s19, 0
      %p181 = por %p179, %p180
      %p182 = scmp.ne.s32.totalorder %s171, %s174
      %p183 = scmp.eq.s32.totalorder %s24, 1
      %p184 = por %p182, %p183
      %p185 = scmp.ne.s32.totalorder %s174, %s175
      %p186 = scmp.eq.s32.totalorder %s24, 0
      %p187 = por %p185, %p186
      %p188 = scmp.ne.s32.totalorder %s174, %s175
      %p189 = scmp.eq.s32.totalorder %s25, 1
      %p190 = por %p188, %p189
      %p192 = scmp.ne.s32.totalorder %s175, %s191
      %p193 = scmp.eq.s32.totalorder %s25, 0
      %p194 = por %p192, %p193
      %s195 = ssub.s32 %s27, %s34
      %p196 = scmp.eq.s32.totalorder %s195, 0
      %s198 = sadd.s32 %s197, 1
      %s199 = scalar_select %p196, %s197, %s198
      %p202 = pneg %p196
      %p203 = scmp.eq.s32.totalorder %s19, 1
      %p204 = por %p202, %p203
      %p205 = scmp.ne.s32.totalorder %s197, %s200
      %p206 = scmp.eq.s32.totalorder %s19, 0
      %p207 = por %p205, %p206
      %p208 = scmp.ne.s32.totalorder %s197, %s200
      %p209 = scmp.eq.s32.totalorder %s24, 1
      %p210 = por %p208, %p209
      %p211 = scmp.ne.s32.totalorder %s200, %s201
      %p212 = scmp.eq.s32.totalorder %s24, 0
      %p213 = por %p211, %p212
      %p214 = scmp.ne.s32.totalorder %s200, %s201
      %p215 = scmp.eq.s32.totalorder %s25, 1
      %p216 = por %p214, %p215
      %p218 = scmp.ne.s32.totalorder %s201, %s217
      %p219 = scmp.eq.s32.totalorder %s25, 0
      %p220 = por %p218, %p219
      %s222 = sadd.s32 %s221, 1
      %p225 = scmp.eq.s32.totalorder %s19, 1
      %p226 = scmp.ne.s32.totalorder %s221, %s223
      %p227 = scmp.eq.s32.totalorder %s19, 0
      %p228 = por %p226, %p227
      %p229 = scmp.ne.s32.totalorder %s221, %s223
      %p230 = scmp.eq.s32.totalorder %s24, 1
      %p231 = por %p229, %p230
      %p232 = scmp.ne.s32.totalorder %s223, %s224
      %p233 = scmp.eq.s32.totalorder %s24, 0
      %p234 = por %p232, %p233
      %p235 = scmp.ne.s32.totalorder %s223, %s224
      %p236 = scmp.eq.s32.totalorder %s25, 1
      %p237 = por %p235, %p236
      %p239 = scmp.ne.s32.totalorder %s224, %s238
      %p240 = scmp.eq.s32.totalorder %s25, 0
      %p241 = por %p239, %p240
      %s243 = sadd.s32 %s242, 1
      %p246 = scmp.eq.s32.totalorder %s19, 1
      %p247 = scmp.ne.s32.totalorder %s242, %s244
      %p248 = scmp.eq.s32.totalorder %s19, 0
      %p249 = por %p247, %p248
      %p250 = scmp.ne.s32.totalorder %s242, %s244
      %p251 = scmp.eq.s32.totalorder %s24, 1
      %p252 = por %p250, %p251
      %p253 = scmp.ne.s32.totalorder %s244, %s245
      %p254 = scmp.eq.s32.totalorder %s24, 0
      %p255 = por %p253, %p254
      %p256 = scmp.ne.s32.totalorder %s244, %s245
      %p257 = scmp.eq.s32.totalorder %s25, 1
      %p258 = por %p256, %p257
      %p260 = scmp.ne.s32.totalorder %s245, %s259
      %p261 = scmp.eq.s32.totalorder %s25, 0
      %p262 = por %p260, %p261
      %s264 = sadd.s32 %s263, 1
      %p267 = scmp.eq.s32.totalorder %s19, 1
      %p268 = scmp.ne.s32.totalorder %s263, %s265
      %p269 = scmp.eq.s32.totalorder %s19, 0
      %p270 = por %p268, %p269
      %p271 = scmp.ne.s32.totalorder %s263, %s265
      %p272 = scmp.eq.s32.totalorder %s24, 1
      %p273 = por %p271, %p272
      %p274 = scmp.ne.s32.totalorder %s265, %s266
      %p275 = scmp.eq.s32.totalorder %s24, 0
      %p276 = por %p274, %p275
      %p277 = scmp.ne.s32.totalorder %s265, %s266
      %p278 = scmp.eq.s32.totalorder %s25, 1
      %p279 = por %p277, %p278
      %p281 = scmp.ne.s32.totalorder %s266, %s280
      %p282 = scmp.eq.s32.totalorder %s25, 0
      %p283 = por %p281, %p282
      %s285 = sadd.s32 %s284, 1
      %p288 = scmp.eq.s32.totalorder %s19, 1
      %p289 = scmp.ne.s32.totalorder %s284, %s286
      %p290 = scmp.eq.s32.totalorder %s19, 0
      %p291 = por %p289, %p290
      %p292 = scmp.ne.s32.totalorder %s284, %s286
      %p293 = scmp.eq.s32.totalorder %s24, 1
      %p294 = por %p292, %p293
      %p295 = scmp.ne.s32.totalorder %s286, %s287
      %p296 = scmp.eq.s32.totalorder %s24, 0
      %p297 = por %p295, %p296
      %p298 = scmp.ne.s32.totalorder %s286, %s287
      %p299 = scmp.eq.s32.totalorder %s25, 1
      %p300 = por %p298, %p299
      %p302 = scmp.ne.s32.totalorder %s287, %s301
      %p303 = scmp.eq.s32.totalorder %s25, 0
      %p304 = por %p302, %p303
      %s306 = sadd.s32 %s305, 1
      %p309 = scmp.eq.s32.totalorder %s19, 1
      %p310 = scmp.ne.s32.totalorder %s305, %s307
      %p311 = scmp.eq.s32.totalorder %s19, 0
      %p312 = por %p310, %p311
      %p313 = scmp.ne.s32.totalorder %s305, %s307
      %p314 = scmp.eq.s32.totalorder %s24, 1
      %p315 = por %p313, %p314
      %p316 = scmp.ne.s32.totalorder %s307, %s308
      %p317 = scmp.eq.s32.totalorder %s24, 0
      %p318 = por %p316, %p317
      %p319 = scmp.ne.s32.totalorder %s307, %s308
      %p320 = scmp.eq.s32.totalorder %s25, 1
      %p321 = por %p319, %p320
      %p323 = scmp.ne.s32.totalorder %s308, %s322
      %p324 = scmp.eq.s32.totalorder %s25, 0
      %p325 = por %p323, %p324
      %s326 = ssub.s32 %s26, %s38
      %p327 = scmp.eq.s32.totalorder %s326, 0
      %s329 = sadd.s32 %s328, 1
      %s330 = scalar_select %p327, %s328, %s329
      %p333 = pneg %p327
      %p334 = scmp.eq.s32.totalorder %s19, 1
      %p335 = por %p333, %p334
      %p336 = scmp.ne.s32.totalorder %s328, %s331
      %p337 = scmp.eq.s32.totalorder %s19, 0
      %p338 = por %p336, %p337
      %p339 = scmp.ne.s32.totalorder %s328, %s331
      %p340 = scmp.eq.s32.totalorder %s24, 1
      %p341 = por %p339, %p340
      %p342 = scmp.ne.s32.totalorder %s331, %s332
      %p343 = scmp.eq.s32.totalorder %s24, 0
      %p344 = por %p342, %p343
      %p345 = scmp.ne.s32.totalorder %s331, %s332
      %p346 = scmp.eq.s32.totalorder %s25, 1
      %p347 = por %p345, %p346
      %p349 = scmp.ne.s32.totalorder %s332, %s348
      %p350 = scmp.eq.s32.totalorder %s25, 0
      %p351 = por %p349, %p350
      %p352 = scmp.le.s32.totalorder 1, %s19
      %p353 = scmp.lt.s32.totalorder %s19, 3
      %p354 = pnand %p352, %p353
      %p355 = pneg %p354
      // Predicated region
      $region9: #{mlp_mixer_forward.3} parent=5 // pred_check
        _
      $region10: #{mlp_mixer_forward.3} parent=5 // pred_check_branch
        %357 = sbr.rel (%p354) target = $region12
      $region11: #{mlp_mixer_forward.3} parent=5 // pred_region
        %s358 = ssub.s32 %s19, 1
        // Predicated region
        $region13: #{mlp_mixer_forward.3} parent=11 // pred_check
          %p359 = pneg %p57
        $region14: #{mlp_mixer_forward.3} parent=11 // pred_check_branch
          %361 = sbr.rel (%p359) target = $region16
        $region15: #{mlp_mixer_forward.3} parent=11 // pred_region
          %s362 = smul.u32 4, %s28
          %p363 = scmp.lt.s32.totalorder %s362, 3
          %s364 = scalar_select %p363, %s362, 3
          %s365 = smul.addr %s364, 8
          %s366 = scalar_lea.vmem %s0, %s365
          %s367 = smul.u32 4, %s28
        $region16: #{mlp_mixer_forward.3} parent=11 // pred_fallthru
          _
        // Predicated region
        $region17: #{mlp_mixer_forward.3} parent=11 // pred_check
          %p368 = pneg %p234
        $region18: #{mlp_mixer_forward.3} parent=11 // pred_check_branch
          %370 = sbr.rel (%p368) target = $region20
        $region19: #{mlp_mixer_forward.3} parent=11 // pred_region
          _
        $region20: #{mlp_mixer_forward.3} parent=11 // pred_fallthru
          _
        // Predicated region
        $region21: #{mlp_mixer_forward.3} parent=11 // pred_check
          %p371 = pneg %p255
        $region22: #{mlp_mixer_forward.3} parent=11 // pred_check_branch
          %373 = sbr.rel (%p371) target = $region24
        $region23: #{mlp_mixer_forward.3} parent=11 // pred_region
          _
        $region24: #{mlp_mixer_forward.3} parent=11 // pred_fallthru
          _
        // Predicated region
        $region25: #{mlp_mixer_forward.3} parent=11 // pred_check
          %p374 = pneg %p276
        $region26: #{mlp_mixer_forward.3} parent=11 // pred_check_branch
          %376 = sbr.rel (%p374) target = $region28
        $region27: #{mlp_mixer_forward.3} parent=11 // pred_region
          _
        $region28: #{mlp_mixer_forward.3} parent=11 // pred_fallthru
          _
        // Predicated region
        $region29: #{mlp_mixer_forward.3} parent=11 // pred_check
          %p377 = pneg %p297
        $region30: #{mlp_mixer_forward.3} parent=11 // pred_check_branch
          %379 = sbr.rel (%p377) target = $region32
        $region31: #{mlp_mixer_forward.3} parent=11 // pred_region
          _
        $region32: #{mlp_mixer_forward.3} parent=11 // pred_fallthru
          _
        // Predicated region
        $region33: #{mlp_mixer_forward.3} parent=11 // pred_check
          %p380 = pneg %p318
        $region34: #{mlp_mixer_forward.3} parent=11 // pred_check_branch
          %382 = sbr.rel (%p380) target = $region36
        $region35: #{mlp_mixer_forward.3} parent=11 // pred_region
          _
        $region36: #{mlp_mixer_forward.3} parent=11 // pred_fallthru
          _
      $region12: #{mlp_mixer_forward.3} parent=5 // pred_fallthru
        _
      %p383 = scmp.lt.s32.totalorder %s19, 2
      // Predicated region
      $region37: #{mlp_mixer_forward.3} parent=5 // pred_check
        %p384 = pneg %p383
      $region38: #{mlp_mixer_forward.3} parent=5 // pred_check_branch
        %386 = sbr.rel (%p384) target = $region40
      $region39: #{mlp_mixer_forward.3} parent=5 // pred_region
        // Predicated region
        $region41: #{mlp_mixer_forward.3} parent=39 // pred_check
          %p387 = pneg %p77
        $region42: #{mlp_mixer_forward.3} parent=39 // pred_check_branch
          %389 = sbr.rel (%p387) target = $region44
        $region43: #{mlp_mixer_forward.3} parent=39 // pred_region
          %p390 = scmp.lt.s32.totalorder %s27, 1
          %s391 = scalar_select %p390, %s27, 1
          %s392 = smul.addr %s391, 2
          %s393 = smul.addr %s392, 4
          %s394 = scalar_lea.vmem %s1, %s393
        $region44: #{mlp_mixer_forward.3} parent=39 // pred_fallthru
          _
        // Predicated region
        $region45: #{mlp_mixer_forward.3} parent=39 // pred_check
          %p395 = pneg %p103
        $region46: #{mlp_mixer_forward.3} parent=39 // pred_check_branch
          %397 = sbr.rel (%p395) target = $region48
        $region47: #{mlp_mixer_forward.3} parent=39 // pred_region
          %p398 = scmp.lt.s32.totalorder %s27, 1
          %s399 = scalar_select %p398, %s27, 1
          %s400 = smul.addr %s399, 2
          %s401 = smul.addr %s400, 4
          %s402 = scalar_lea.vmem %s2, %s401
        $region48: #{mlp_mixer_forward.3} parent=39 // pred_fallthru
          _
        // Predicated region
        $region49: #{mlp_mixer_forward.3} parent=39 // pred_check
          %p403 = pneg %p129
        $region50: #{mlp_mixer_forward.3} parent=39 // pred_check_branch
          %405 = sbr.rel (%p403) target = $region52
        $region51: #{mlp_mixer_forward.3} parent=39 // pred_region
          %p406 = scmp.lt.s32.totalorder %s27, 1
          %s407 = scalar_select %p406, %s27, 1
          %s408 = smul.addr %s407, 4
          %s409 = smul.addr %s408, 4
          %s410 = scalar_lea.vmem %s3, %s409
        $region52: #{mlp_mixer_forward.3} parent=39 // pred_fallthru
          _
        // Predicated region
        $region53: #{mlp_mixer_forward.3} parent=39 // pred_check
          %p411 = pneg %p155
        $region54: #{mlp_mixer_forward.3} parent=39 // pred_check_branch
          %413 = sbr.rel (%p411) target = $region56
        $region55: #{mlp_mixer_forward.3} parent=39 // pred_region
          %p414 = scmp.lt.s32.totalorder %s27, 1
          %s415 = scalar_select %p414, %s27, 1
          %s416 = smul.addr %s415, 8
          %s417 = smul.addr %s416, 4
          %s418 = scalar_lea.vmem %s4, %s417
        $region56: #{mlp_mixer_forward.3} parent=39 // pred_fallthru
          _
        // Predicated region
        $region57: #{mlp_mixer_forward.3} parent=39 // pred_check
          %p419 = pneg %p181
        $region58: #{mlp_mixer_forward.3} parent=39 // pred_check_branch
          %421 = sbr.rel (%p419) target = $region60
        $region59: #{mlp_mixer_forward.3} parent=39 // pred_region
          %p422 = scmp.lt.s32.totalorder %s27, 1
          %s423 = scalar_select %p422, %s27, 1
          %s424 = smul.addr %s423, 8
          %s425 = scalar_lea.vmem %s5, %s424
        $region60: #{mlp_mixer_forward.3} parent=39 // pred_fallthru
          _
        // Predicated region
        $region61: #{mlp_mixer_forward.3} parent=39 // pred_check
          %p426 = pneg %p207
        $region62: #{mlp_mixer_forward.3} parent=39 // pred_check_branch
          %428 = sbr.rel (%p426) target = $region64
        $region63: #{mlp_mixer_forward.3} parent=39 // pred_region
          %p429 = scmp.lt.s32.totalorder %s27, 1
          %s430 = scalar_select %p429, %s27, 1
          %s431 = smul.addr %s430, 2
          %s432 = smul.addr %s431, 8
          %s433 = scalar_lea.vmem %s6, %s432
        $region64: #{mlp_mixer_forward.3} parent=39 // pred_fallthru
          _
      $region40: #{mlp_mixer_forward.3} parent=5 // pred_fallthru
        _
      %p434 = scmp.le.s32.totalorder 1, %s19
      %p435 = scmp.lt.s32.totalorder %s19, 3
      %p436 = pnand %p434, %p435
      %p437 = pneg %p436
      // Predicated region
      $region65: #{mlp_mixer_forward.3} parent=5 // pred_check
        _
      $region66: #{mlp_mixer_forward.3} parent=5 // pred_check_branch
        %439 = sbr.rel (%p436) target = $region68
      $region67: #{mlp_mixer_forward.3} parent=5 // pred_region
        %s440 = ssub.s32 %s19, 1
        %s441 = smul.u32 4, %s28
        %p442 = scmp.lt.s32.totalorder %s441, 3
        %s443 = scalar_select %p442, %s441, 3
        %s444 = smul.addr %s443, 8
        %s445 = scalar_lea.vmem %s0, %s444
        %p446 = pneg %p57
        %p447 = pneg %p54
        %p448 = scmp.lt.s32.totalorder %s29, 1
        %s449 = scalar_select %p448, %s29, 1
        %s450 = smul.addr %s449, 2
        %s451 = smul.addr %s450, 4
        %s452 = scalar_lea.vmem %s1, %s451
        %p453 = pneg %p83
        %p454 = pneg %p80
        %p455 = scmp.lt.s32.totalorder %s29, 1
        %s456 = scalar_select %p455, %s29, 1
        %s457 = smul.addr %s456, 2
        %s458 = smul.addr %s457, 4
        %s459 = scalar_lea.vmem %s2, %s458
        %p460 = pneg %p109
        %p461 = pneg %p106
        %p462 = scmp.lt.s32.totalorder %s29, 1
        %s463 = scalar_select %p462, %s29, 1
        %s464 = smul.addr %s463, 4
        %s465 = smul.addr %s464, 4
        %s466 = scalar_lea.vmem %s3, %s465
        %p467 = pneg %p135
        %p468 = pneg %p132
        %p469 = scmp.lt.s32.totalorder %s29, 1
        %s470 = scalar_select %p469, %s29, 1
        %s471 = smul.addr %s470, 8
        %s472 = smul.addr %s471, 4
        %s473 = scalar_lea.vmem %s4, %s472
        %p474 = pneg %p161
        %p475 = pneg %p158
        %p476 = scmp.lt.s32.totalorder %s29, 1
        %s477 = scalar_select %p476, %s29, 1
        %s478 = smul.addr %s477, 8
        %s479 = scalar_lea.vmem %s5, %s478
        %p480 = pneg %p187
        %p481 = pneg %p184
        %p482 = scmp.lt.s32.totalorder %s29, 1
        %s483 = scalar_select %p482, %s29, 1
        %s484 = smul.addr %s483, 2
        %s485 = smul.addr %s484, 8
        %s486 = scalar_lea.vmem %s6, %s485
        %p487 = pneg %p213
        %p488 = pneg %p210
        %p489 = pneg %p234
        %p490 = pneg %p231
        %p491 = pneg %p255
        %p492 = pneg %p252
        %p493 = pneg %p276
        %p494 = pneg %p273
        %p495 = pneg %p297
        %p496 = pneg %p294
        %p497 = pneg %p318
        %p498 = pneg %p315
        %p499 = pneg %p344
        %p500 = pneg %p341
        %s501 = smul.u32 4, %s28
        %p502 = scmp.lt.s32.totalorder %s501, 3
        %s503 = scalar_select %p502, %s501, 3
        %s504 = smul.addr %s503, 8
        %s505 = scalar_lea.vmem %s0, %s504
        %s506 = smul.u32 4, %s28
        %p507 = scmp.lt.s32.totalorder %s29, 1
        %s508 = scalar_select %p507, %s29, 1
        %s509 = smul.addr %s508, 2
        %s510 = smul.addr %s509, 4
        %s511 = scalar_lea.vmem %s1, %s510
        %p512 = scmp.lt.s32.totalorder %s29, 1
        %s513 = scalar_select %p512, %s29, 1
        %s514 = smul.addr %s513, 2
        %s515 = smul.addr %s514, 4
        %s516 = scalar_lea.vmem %s2, %s515
        %p517 = scmp.lt.s32.totalorder %s29, 1
        %s518 = scalar_select %p517, %s29, 1
        %s519 = smul.addr %s518, 4
        %s520 = smul.addr %s519, 4
        %s521 = scalar_lea.vmem %s3, %s520
        %p522 = scmp.lt.s32.totalorder %s29, 1
        %s523 = scalar_select %p522, %s29, 1
        %s524 = smul.addr %s523, 8
        %s525 = smul.addr %s524, 4
        %s526 = scalar_lea.vmem %s4, %s525
        %p527 = scmp.lt.s32.totalorder %s29, 1
        %s528 = scalar_select %p527, %s29, 1
        %s529 = smul.addr %s528, 8
        %s530 = scalar_lea.vmem %s5, %s529
        %p531 = scmp.lt.s32.totalorder %s29, 1
        %s532 = scalar_select %p531, %s29, 1
        %s533 = smul.addr %s532, 2
        %s534 = smul.addr %s533, 8
        %s535 = scalar_lea.vmem %s6, %s534
        %p537 = scmp.eq.s32.totalorder %s29, 0
        // Predicated region
        $region69: #{mlp_mixer_forward.3} parent=67 // pred_check
          %p538 = pneg %p537
        $region70: #{mlp_mixer_forward.3} parent=67 // pred_check_branch
          %540 = sbr.rel (%p538) target = $region72
        $region71: #{mlp_mixer_forward.3} parent=67 // pred_region
          %v541 = vld [vmem:[%s505] sm:$0xff]
          %v542 = vld [vmem:[%s505 + $0x8] sm:$0xff]
          %v543 = vld [vmem:[%s505 + $0x10] sm:$0xff]
          %v544 = vld [vmem:[%s505 + $0x18] sm:$0xff]
          %vm545 = vcmask 261120
          %546 = vst.msk [vmem:[#allocation2] sm:$0xff] %vm545, %v541
          %547 = vst.msk [vmem:[#allocation2 + $0x8] sm:$0xff] %vm545, %v542
          %548 = vst.msk [vmem:[#allocation2 + $0x10] sm:$0xff] %vm545, %v543
          %549 = vst.msk [vmem:[#allocation2 + $0x18] sm:$0xff] %vm545, %v544
        $region72: #{mlp_mixer_forward.3} parent=67 // pred_fallthru
          _
        %v550 = vld [vmem:[#allocation2] sm:$0xff]
        %v551 = vld [vmem:[#allocation2 + $0x8] sm:$0xff]
        %v552 = vld [vmem:[#allocation2 + $0x10] sm:$0xff]
        %v553 = vld [vmem:[#allocation2 + $0x18] sm:$0xff]
        %v554 = vld [vmem:[%s530] sm:$0x1]
        %v555 = vld [vmem:[%s530 + $0x1] sm:$0x1]
        %v556 = vld [vmem:[%s530 + $0x2] sm:$0x1]
        %v557 = vld [vmem:[%s530 + $0x3] sm:$0x1]
        %v558 = vld [vmem:[%s530 + $0x4] sm:$0x1]
        %v559 = vld [vmem:[%s530 + $0x5] sm:$0x1]
        %v560 = vld [vmem:[%s535] sm:$0xff]
        %v561 = vld [vmem:[%s535 + $0x8] sm:$0xff]
        %vm562 = vcmask 261120
        %v563 = vsel %vm562, %v550, 0.0
        %564 = vadd.xlane.f32.xlu0 %v563
        %v565 = vpop.xlane.xlu0 %564
        %v566 = vsel %vm562, %v551, 0.0
        %567 = vadd.xlane.f32.xlu0 %v566
        %v568 = vpop.xlane.xlu0 %567
        %v569 = vsel %vm562, %v552, 0.0
        %570 = vadd.xlane.f32.xlu0 %v569
        %v571 = vpop.xlane.xlu0 %570
        %v572 = vsel %vm562, %v553, 0.0
        %573 = vadd.xlane.f32.xlu0 %v572
        %v574 = vpop.xlane.xlu0 %573
        %v575 = vrcp.pop 32.0
        %v576 = vmul.f32 32.0, %v575
        %v577 = vsub.f32 1.0, %v576
        %v578 = vmul.f32 %v575, %v577
        %v579 = vadd.f32 %v575, %v578
        %vm580 = vweird.f32 %v575
        %v581 = vsel %vm580, %v575, %v579
        %v582 = vmul.f32 %v565, %v581
        %v583 = vmul.f32 %v568, %v581
        %v584 = vmul.f32 %v571, %v581
        %v585 = vmul.f32 %v574, %v581
        %v586 = vsub.f32 %v550, %v582
        %v587 = vsub.f32 %v551, %v583
        %v588 = vsub.f32 %v552, %v584
        %v589 = vsub.f32 %v553, %v585
        %v590 = vmul.f32 %v586, %v586
        %v591 = vmul.f32 %v587, %v587
        %v592 = vmul.f32 %v588, %v588
        %v593 = vmul.f32 %v589, %v589
        %v594 = vsel %vm562, %v590, 0.0
        %595 = vadd.xlane.f32.xlu0 %v594
        %v596 = vpop.xlane.xlu0 %595
        %v597 = vsel %vm562, %v591, 0.0
        %598 = vadd.xlane.f32.xlu0 %v597
        %v599 = vpop.xlane.xlu0 %598
        %v600 = vsel %vm562, %v592, 0.0
        %601 = vadd.xlane.f32.xlu0 %v600
        %v602 = vpop.xlane.xlu0 %601
        %v603 = vsel %vm562, %v593, 0.0
        %604 = vadd.xlane.f32.xlu0 %v603
        %v605 = vpop.xlane.xlu0 %604
        %v606 = vmul.f32 %v596, %v581
        %v607 = vmul.f32 %v599, %v581
        %v608 = vmul.f32 %v602, %v581
        %v609 = vmul.f32 %v605, %v581
        %v610 = vadd.f32 %v606, 1e-05
        %v611 = vadd.f32 %v607, 1e-05
        %v612 = vadd.f32 %v608, 1e-05
        %v613 = vadd.f32 %v609, 1e-05
        %v614 = vrsqrt.pop %v610
        %v615 = vmul.f32 %v614, %v610
        %v616 = vmul.f32 %v615, %v614
        %v617 = vmul.f32 0.5, %v616
        %v618 = vsub.f32 1.5, %v617
        %v619 = vmul.f32 %v614, %v618
        %vm620 = vweird.f32 %v610
        %vm621 = vweird.f32 %v614
        %vm622 = vmor %vm620, %vm621
        %v623 = vsel %vm622, %v614, %v619
        %v624 = vrsqrt.pop %v611
        %v625 = vmul.f32 %v624, %v611
        %v626 = vmul.f32 %v625, %v624
        %v627 = vmul.f32 0.5, %v626
        %v628 = vsub.f32 1.5, %v627
        %v629 = vmul.f32 %v624, %v628
        %vm630 = vweird.f32 %v611
        %vm631 = vweird.f32 %v624
        %vm632 = vmor %vm630, %vm631
        %v633 = vsel %vm632, %v624, %v629
        %v634 = vrsqrt.pop %v612
        %v635 = vmul.f32 %v634, %v612
        %v636 = vmul.f32 %v635, %v634
        %v637 = vmul.f32 0.5, %v636
        %v638 = vsub.f32 1.5, %v637
        %v639 = vmul.f32 %v634, %v638
        %vm640 = vweird.f32 %v612
        %vm641 = vweird.f32 %v634
        %vm642 = vmor %vm640, %vm641
        %v643 = vsel %vm642, %v634, %v639
        %v644 = vrsqrt.pop %v613
        %v645 = vmul.f32 %v644, %v613
        %v646 = vmul.f32 %v645, %v644
        %v647 = vmul.f32 0.5, %v646
        %v648 = vsub.f32 1.5, %v647
        %v649 = vmul.f32 %v644, %v648
        %vm650 = vweird.f32 %v613
        %vm651 = vweird.f32 %v644
        %vm652 = vmor %vm650, %vm651
        %v653 = vsel %vm652, %v644, %v649
        %v654 = vmul.f32 %v586, %v623
        %v655 = vmul.f32 %v587, %v633
        %v656 = vmul.f32 %v588, %v643
        %v657 = vmul.f32 %v589, %v653
        %v658 = vperm.slane %v554, 0
        %v659 = vmul.f32 %v654, %v658
        %v660 = vmul.f32 %v655, %v658
        %v661 = vmul.f32 %v656, %v658
        %v662 = vmul.f32 %v657, %v658
        %v663 = vperm.slane %v555, 0
        %v664 = vadd.f32 %v659, %v663
        %v665 = vadd.f32 %v660, %v663
        %v666 = vadd.f32 %v661, %v663
        %v667 = vadd.f32 %v662, %v663
        %v668 = vld [vmem:[%s511] sm:$0xf]
        %v669 = vld [vmem:[%s511 + $0x4] sm:$0xf]
        %v670 = vpack.c.bf16 %v665, %v664
        %672 = vset.pattern.permute.xlu0 0
        %673 = vperm.xlu0 %672, %v560
        %v674 = vpop.permute.xlu0 %673
        %677 = vset.pattern.permute.xlu0 0
        %678 = vperm.xlu0 %677, %v561
        %v679 = vpop.permute.xlu0 %678
        %v683 = vunpack.c.l.b16 %v668
        %v684 = vunpack.c.l.b16 %v669
        %v685 = vpack.c.b16 %v684, %v683
        %vm686 = vcmask 130048
        %v688 = vsel %vm686, %v685, 0
        %690 = vmatpush.bf16.msra.mxu0 0
        %691 = vmatpush.bf16.msra.mxu0 0
        %692 = vmatpush.bf16.msra.mxu0 0
        %693 = vmatpush.bf16.msra.mxu0 0
        %694 = vmatpush.bf16.msra.mxu0 0
        %695 = vmatpush.bf16.msra.mxu0 0
        %696 = vmatpush.bf16.msra.mxu0 0
        %697 = vmatpush.bf16.msra.mxu0 %v670
        %698 = vmatmul.bf16.gmra.mxu0 %v688
        %v699 = vpop.f32.mrf.mxu0
        %v700 = vadd.f32 %v674, %v699
        %v701 = vpop.f32.mrf.mxu0
        %v702 = vadd.f32 %v679, %v701
        %703 = vdwg.mxu0
        %v704 = vmul.f32 %v700, 0.5
        %v705 = vmul.f32 %v702, 0.5
        %v706 = vmul.f32 %v700, 0.70710677
        %v707 = vmul.f32 %v702, 0.70710677
        %v708 = vand.u32 2147483647, %v706
        %v709 = vand.u32 2147483647, %v707
        %v710 = vmul.f32 %v708, 0.3275911
        %v711 = vmul.f32 %v709, 0.3275911
        %v712 = vadd.f32 %v710, 1.0
        %v713 = vadd.f32 %v711, 1.0
        %v714 = vrcp.pop %v712
        %v715 = vmul.f32 %v712, %v714
        %v716 = vsub.f32 1.0, %v715
        %v717 = vmul.f32 %v714, %v716
        %v718 = vadd.f32 %v714, %v717
        %vm719 = vweird.f32 %v712
        %vm720 = vweird.f32 %v714
        %vm721 = vmor %vm719, %vm720
        %v722 = vsel %vm721, %v714, %v718
        %v723 = vand.u32 2147483647, %v712
        %vm724 = vcmp.eq.f32.partialorder %v723, 8.507059e+37
        %v725 = vand.u32 %v712, 2147483648
        %v726 = vor.u32 1.1754944e-38, %v725
        %v727 = vsel %vm724, %v726, %v722
        %v728 = vmul.f32 1.0, %v727
        %v729 = vrcp.pop %v713
        %v730 = vmul.f32 %v713, %v729
        %v731 = vsub.f32 1.0, %v730
        %v732 = vmul.f32 %v729, %v731
        %v733 = vadd.f32 %v729, %v732
        %vm734 = vweird.f32 %v713
        %vm735 = vweird.f32 %v729
        %vm736 = vmor %vm734, %vm735
        %v737 = vsel %vm736, %v729, %v733
        %v738 = vand.u32 2147483647, %v713
        %vm739 = vcmp.eq.f32.partialorder %v738, 8.507059e+37
        %v740 = vand.u32 %v713, 2147483648
        %v741 = vor.u32 1.1754944e-38, %v740
        %v742 = vsel %vm739, %v741, %v737
        %v743 = vmul.f32 1.0, %v742
        %v744 = vmul.f32 %v728, 1.0614054
        %v745 = vmul.f32 %v743, 1.0614054
        %v746 = vadd.f32 %v744, -1.4531521
        %v747 = vadd.f32 %v745, -1.4531521
        %v748 = vmul.f32 %v746, %v728
        %v749 = vmul.f32 %v747, %v743
        %v750 = vadd.f32 %v748, 1.4214138
        %v751 = vadd.f32 %v749, 1.4214138
        %v752 = vmul.f32 %v750, %v728
        %v753 = vmul.f32 %v751, %v743
        %v754 = vadd.f32 %v752, -0.28449672
        %v755 = vadd.f32 %v753, -0.28449672
        %v756 = vmul.f32 %v754, %v728
        %v757 = vmul.f32 %v755, %v743
        %v758 = vadd.f32 %v756, 0.2548296
        %v759 = vadd.f32 %v757, 0.2548296
        %v760 = vmul.f32 %v758, %v728
        %v761 = vmul.f32 %v759, %v743
        %v762 = vsub.f32 0.0, %v708
        %v763 = vsub.f32 0.0, %v709
        %v764 = vmul.f32 %v762, %v708
        %v765 = vmul.f32 %v763, %v709
        %v766 = vmul.f32 %v764, 1.442695
        %v767 = vpow.pop %v766
        %v768 = vmul.f32 %v765, 1.442695
        %v769 = vpow.pop %v768
        %v770 = vmul.f32 %v760, %v767
        %v771 = vmul.f32 %v761, %v769
        %v772 = vsub.f32 1.0, %v770
        %v773 = vsub.f32 1.0, %v771
        %vm774 = vcmp.ge.f32.partialorder %v706, 0.0
        %vm775 = vcmp.ge.f32.partialorder %v707, 0.0
        %v776 = vsub.f32 0.0, %v772
        %v777 = vsub.f32 0.0, %v773
        %v778 = vsel %vm774, %v772, %v776
        %v779 = vsel %vm775, %v773, %v777
        %v780 = vadd.f32 %v778, 1.0
        %v781 = vadd.f32 %v779, 1.0
        %v782 = vmul.f32 %v704, %v780
        %v783 = vmul.f32 %v705, %v781
        %v784 = vld [vmem:[%s516] sm:$0xf]
        %v785 = vld [vmem:[%s516 + $0x4] sm:$0xf]
        %v786 = vpack.c.bf16 %v783, %v782
        %787 = vset.pattern.permute.xlu0 1
        %788 = vperm.xlu0 %787, %v560
        %v789 = vpop.permute.xlu0 %788
        %791 = vset.pattern.permute.xlu0 1
        %792 = vperm.xlu0 %791, %v561
        %v793 = vpop.permute.xlu0 %792
        %v797 = vunpack.c.l.b16 %v784
        %v798 = vunpack.c.l.b16 %v785
        %v799 = vpack.c.b16 %v798, %v797
        %v801 = vsel %vm686, %v799, 0
        %803 = vmatpush.bf16.msra.mxu0 0
        %804 = vmatpush.bf16.msra.mxu0 0
        %805 = vmatpush.bf16.msra.mxu0 0
        %806 = vmatpush.bf16.msra.mxu0 0
        %807 = vmatpush.bf16.msra.mxu0 0
        %808 = vmatpush.bf16.msra.mxu0 0
        %809 = vmatpush.bf16.msra.mxu0 0
        %810 = vmatpush.bf16.msra.mxu0 %v786
        %811 = vmatmul.bf16.gmra.mxu0 %v801
        %v812 = vpop.f32.mrf.mxu0
        %v813 = vadd.f32 %v789, %v812
        %v814 = vpop.f32.mrf.mxu0
        %v815 = vadd.f32 %v793, %v814
        %816 = vdwg.mxu0
        %v817 = vadd.f32 %v813, %v550
        %v818 = vadd.f32 %v815, %v551
        %819 = vst.msk [vmem:[#allocation2] sm:$0xff] %vm562, %v817
        %820 = vst.msk [vmem:[#allocation2 + $0x8] sm:$0xff] %vm562, %v818
        %v821 = vld [vmem:[%s511] sm:$0xf]
        %v822 = vld [vmem:[%s511 + $0x4] sm:$0xf]
        %v823 = vpack.c.bf16 %v667, %v666
        %v826 = vunpack.c.l.b16 %v821
        %v827 = vunpack.c.l.b16 %v822
        %v828 = vpack.c.b16 %v827, %v826
        %v830 = vsel %vm686, %v828, 0
        %832 = vmatpush.bf16.msra.mxu0 0
        %833 = vmatpush.bf16.msra.mxu0 0
        %834 = vmatpush.bf16.msra.mxu0 0
        %835 = vmatpush.bf16.msra.mxu0 0
        %836 = vmatpush.bf16.msra.mxu0 0
        %837 = vmatpush.bf16.msra.mxu0 0
        %838 = vmatpush.bf16.msra.mxu0 0
        %839 = vmatpush.bf16.msra.mxu0 %v823
        %840 = vmatmul.bf16.gmra.mxu0 %v830
        %v841 = vpop.f32.mrf.mxu0
        %v842 = vadd.f32 %v674, %v841
        %v843 = vpop.f32.mrf.mxu0
        %v844 = vadd.f32 %v679, %v843
        %845 = vdwg.mxu0
        %v846 = vmul.f32 %v842, 0.5
        %v847 = vmul.f32 %v844, 0.5
        %v848 = vmul.f32 %v842, 0.70710677
        %v849 = vmul.f32 %v844, 0.70710677
        %v850 = vand.u32 2147483647, %v848
        %v851 = vand.u32 2147483647, %v849
        %v852 = vmul.f32 %v850, 0.3275911
        %v853 = vmul.f32 %v851, 0.3275911
        %v854 = vadd.f32 %v852, 1.0
        %v855 = vadd.f32 %v853, 1.0
        %v856 = vrcp.pop %v854
        %v857 = vmul.f32 %v854, %v856
        %v858 = vsub.f32 1.0, %v857
        %v859 = vmul.f32 %v856, %v858
        %v860 = vadd.f32 %v856, %v859
        %vm861 = vweird.f32 %v854
        %vm862 = vweird.f32 %v856
        %vm863 = vmor %vm861, %vm862
        %v864 = vsel %vm863, %v856, %v860
        %v865 = vand.u32 2147483647, %v854
        %vm866 = vcmp.eq.f32.partialorder %v865, 8.507059e+37
        %v867 = vand.u32 %v854, 2147483648
        %v868 = vor.u32 1.1754944e-38, %v867
        %v869 = vsel %vm866, %v868, %v864
        %v870 = vmul.f32 1.0, %v869
        %v871 = vrcp.pop %v855
        %v872 = vmul.f32 %v855, %v871
        %v873 = vsub.f32 1.0, %v872
        %v874 = vmul.f32 %v871, %v873
        %v875 = vadd.f32 %v871, %v874
        %vm876 = vweird.f32 %v855
        %vm877 = vweird.f32 %v871
        %vm878 = vmor %vm876, %vm877
        %v879 = vsel %vm878, %v871, %v875
        %v880 = vand.u32 2147483647, %v855
        %vm881 = vcmp.eq.f32.partialorder %v880, 8.507059e+37
        %v882 = vand.u32 %v855, 2147483648
        %v883 = vor.u32 1.1754944e-38, %v882
        %v884 = vsel %vm881, %v883, %v879
        %v885 = vmul.f32 1.0, %v884
        %v886 = vmul.f32 %v870, 1.0614054
        %v887 = vmul.f32 %v885, 1.0614054
        %v888 = vadd.f32 %v886, -1.4531521
        %v889 = vadd.f32 %v887, -1.4531521
        %v890 = vmul.f32 %v888, %v870
        %v891 = vmul.f32 %v889, %v885
        %v892 = vadd.f32 %v890, 1.4214138
        %v893 = vadd.f32 %v891, 1.4214138
        %v894 = vmul.f32 %v892, %v870
        %v895 = vmul.f32 %v893, %v885
        %v896 = vadd.f32 %v894, -0.28449672
        %v897 = vadd.f32 %v895, -0.28449672
        %v898 = vmul.f32 %v896, %v870
        %v899 = vmul.f32 %v897, %v885
        %v900 = vadd.f32 %v898, 0.2548296
        %v901 = vadd.f32 %v899, 0.2548296
        %v902 = vmul.f32 %v900, %v870
        %v903 = vmul.f32 %v901, %v885
        %v904 = vsub.f32 0.0, %v850
        %v905 = vsub.f32 0.0, %v851
        %v906 = vmul.f32 %v904, %v850
        %v907 = vmul.f32 %v905, %v851
        %v908 = vmul.f32 %v906, 1.442695
        %v909 = vpow.pop %v908
        %v910 = vmul.f32 %v907, 1.442695
        %v911 = vpow.pop %v910
        %v912 = vmul.f32 %v902, %v909
        %v913 = vmul.f32 %v903, %v911
        %v914 = vsub.f32 1.0, %v912
        %v915 = vsub.f32 1.0, %v913
        %vm916 = vcmp.ge.f32.partialorder %v848, 0.0
        %vm917 = vcmp.ge.f32.partialorder %v849, 0.0
        %v918 = vsub.f32 0.0, %v914
        %v919 = vsub.f32 0.0, %v915
        %v920 = vsel %vm916, %v914, %v918
        %v921 = vsel %vm917, %v915, %v919
        %v922 = vadd.f32 %v920, 1.0
        %v923 = vadd.f32 %v921, 1.0
        %v924 = vmul.f32 %v846, %v922
        %v925 = vmul.f32 %v847, %v923
        %v926 = vld [vmem:[%s516] sm:$0xf]
        %v927 = vld [vmem:[%s516 + $0x4] sm:$0xf]
        %v928 = vpack.c.bf16 %v925, %v924
        %v931 = vunpack.c.l.b16 %v926
        %v932 = vunpack.c.l.b16 %v927
        %v933 = vpack.c.b16 %v932, %v931
        %v935 = vsel %vm686, %v933, 0
        %937 = vmatpush.bf16.msra.mxu0 0
        %938 = vmatpush.bf16.msra.mxu0 0
        %939 = vmatpush.bf16.msra.mxu0 0
        %940 = vmatpush.bf16.msra.mxu0 0
        %941 = vmatpush.bf16.msra.mxu0 0
        %942 = vmatpush.bf16.msra.mxu0 0
        %943 = vmatpush.bf16.msra.mxu0 0
        %944 = vmatpush.bf16.msra.mxu0 %v928
        %945 = vmatmul.bf16.gmra.mxu0 %v935
        %v946 = vpop.f32.mrf.mxu0
        %v947 = vadd.f32 %v789, %v946
        %v948 = vpop.f32.mrf.mxu0
        %v949 = vadd.f32 %v793, %v948
        %950 = vdwg.mxu0
        %v951 = vadd.f32 %v947, %v552
        %v952 = vadd.f32 %v949, %v553
        %953 = vst.msk [vmem:[#allocation2 + $0x10] sm:$0xff] %vm562, %v951
        %954 = vst.msk [vmem:[#allocation2 + $0x18] sm:$0xff] %vm562, %v952
        %v955 = vld [vmem:[#allocation2] sm:$0xff]
        %v956 = vld [vmem:[#allocation2 + $0x8] sm:$0xff]
        %v957 = vld [vmem:[#allocation2 + $0x10] sm:$0xff]
        %v958 = vld [vmem:[#allocation2 + $0x18] sm:$0xff]
        %v959 = vsel %vm562, %v955, 0.0
        %960 = vadd.xlane.f32.xlu0 %v959
        %v961 = vpop.xlane.xlu0 %960
        %v962 = vsel %vm562, %v956, 0.0
        %963 = vadd.xlane.f32.xlu0 %v962
        %v964 = vpop.xlane.xlu0 %963
        %v965 = vsel %vm562, %v957, 0.0
        %966 = vadd.xlane.f32.xlu0 %v965
        %v967 = vpop.xlane.xlu0 %966
        %v968 = vsel %vm562, %v958, 0.0
        %969 = vadd.xlane.f32.xlu0 %v968
        %v970 = vpop.xlane.xlu0 %969
        %v971 = vmul.f32 %v961, %v581
        %v972 = vmul.f32 %v964, %v581
        %v973 = vmul.f32 %v967, %v581
        %v974 = vmul.f32 %v970, %v581
        %v975 = vsub.f32 %v955, %v971
        %v976 = vsub.f32 %v956, %v972
        %v977 = vsub.f32 %v957, %v973
        %v978 = vsub.f32 %v958, %v974
        %v979 = vmul.f32 %v975, %v975
        %v980 = vmul.f32 %v976, %v976
        %v981 = vmul.f32 %v977, %v977
        %v982 = vmul.f32 %v978, %v978
        %v983 = vsel %vm562, %v979, 0.0
        %984 = vadd.xlane.f32.xlu0 %v983
        %v985 = vpop.xlane.xlu0 %984
        %v986 = vsel %vm562, %v980, 0.0
        %987 = vadd.xlane.f32.xlu0 %v986
        %v988 = vpop.xlane.xlu0 %987
        %v989 = vsel %vm562, %v981, 0.0
        %990 = vadd.xlane.f32.xlu0 %v989
        %v991 = vpop.xlane.xlu0 %990
        %v992 = vsel %vm562, %v982, 0.0
        %993 = vadd.xlane.f32.xlu0 %v992
        %v994 = vpop.xlane.xlu0 %993
        %v995 = vmul.f32 %v985, %v581
        %v996 = vmul.f32 %v988, %v581
        %v997 = vmul.f32 %v991, %v581
        %v998 = vmul.f32 %v994, %v581
        %v999 = vadd.f32 %v995, 1e-05
        %v1000 = vadd.f32 %v996, 1e-05
        %v1001 = vadd.f32 %v997, 1e-05
        %v1002 = vadd.f32 %v998, 1e-05
        %v1003 = vrsqrt.pop %v999
        %v1004 = vmul.f32 %v1003, %v999
        %v1005 = vmul.f32 %v1004, %v1003
        %v1006 = vmul.f32 0.5, %v1005
        %v1007 = vsub.f32 1.5, %v1006
        %v1008 = vmul.f32 %v1003, %v1007
        %vm1009 = vweird.f32 %v999
        %vm1010 = vweird.f32 %v1003
        %vm1011 = vmor %vm1009, %vm1010
        %v1012 = vsel %vm1011, %v1003, %v1008
        %v1013 = vrsqrt.pop %v1000
        %v1014 = vmul.f32 %v1013, %v1000
        %v1015 = vmul.f32 %v1014, %v1013
        %v1016 = vmul.f32 0.5, %v1015
        %v1017 = vsub.f32 1.5, %v1016
        %v1018 = vmul.f32 %v1013, %v1017
        %vm1019 = vweird.f32 %v1000
        %vm1020 = vweird.f32 %v1013
        %vm1021 = vmor %vm1019, %vm1020
        %v1022 = vsel %vm1021, %v1013, %v1018
        %v1023 = vrsqrt.pop %v1001
        %v1024 = vmul.f32 %v1023, %v1001
        %v1025 = vmul.f32 %v1024, %v1023
        %v1026 = vmul.f32 0.5, %v1025
        %v1027 = vsub.f32 1.5, %v1026
        %v1028 = vmul.f32 %v1023, %v1027
        %vm1029 = vweird.f32 %v1001
        %vm1030 = vweird.f32 %v1023
        %vm1031 = vmor %vm1029, %vm1030
        %v1032 = vsel %vm1031, %v1023, %v1028
        %v1033 = vrsqrt.pop %v1002
        %v1034 = vmul.f32 %v1033, %v1002
        %v1035 = vmul.f32 %v1034, %v1033
        %v1036 = vmul.f32 0.5, %v1035
        %v1037 = vsub.f32 1.5, %v1036
        %v1038 = vmul.f32 %v1033, %v1037
        %vm1039 = vweird.f32 %v1002
        %vm1040 = vweird.f32 %v1033
        %vm1041 = vmor %vm1039, %vm1040
        %v1042 = vsel %vm1041, %v1033, %v1038
        %v1043 = vmul.f32 %v975, %v1012
        %v1044 = vmul.f32 %v976, %v1022
        %v1045 = vmul.f32 %v977, %v1032
        %v1046 = vmul.f32 %v978, %v1042
        %v1047 = vperm.slane %v556, 0
        %v1048 = vmul.f32 %v1043, %v1047
        %v1049 = vmul.f32 %v1044, %v1047
        %v1050 = vmul.f32 %v1045, %v1047
        %v1051 = vmul.f32 %v1046, %v1047
        %v1052 = vperm.slane %v557, 0
        %v1053 = vadd.f32 %v1048, %v1052
        %v1054 = vadd.f32 %v1049, %v1052
        %v1055 = vadd.f32 %v1050, %v1052
        %v1056 = vadd.f32 %v1051, %v1052
        %v1057 = vpack.c.bf16 %v1054, %v1053
        %v1058 = vpack.c.bf16 %v1056, %v1055
        %v1059 = vld [vmem:[%s521] sm:$0xf]
        %v1060 = vld [vmem:[%s521 + $0x4] sm:$0xf]
        %v1061 = vld [vmem:[%s521 + $0x8] sm:$0xf]
        %v1062 = vld [vmem:[%s521 + $0xc] sm:$0xf]
        %v1063 = vperm.slane %v559, 0
        %v1068 = vunpack.c.l.b16 %v1059
        %v1069 = vunpack.c.l.b16 %v1060
        %v1070 = vunpack.c.l.b16 %v1061
        %v1071 = vunpack.c.l.b16 %v1062
        %v1072 = vpack.c.b16 %v1069, %v1068
        %v1073 = vpack.c.b16 %v1071, %v1070
        %v1077 = vsel %vm562, %v1057, 0
        %v1080 = vsel %vm562, %v1058, 0
        %1082 = vmatpush.bf16.msra.mxu0 0
        %1083 = vmatpush.bf16.msra.mxu0 0
        %1084 = vmatpush.bf16.msra.mxu0 0
        %1085 = vmatpush.bf16.msra.mxu0 0
        %1086 = vmatpush.bf16.msra.mxu0 0
        %1087 = vmatpush.bf16.msra.mxu0 0
        %1088 = vmatpush.bf16.msra.mxu0 %v1073
        %1089 = vmatpush.bf16.msra.mxu0 %v1072
        %1090 = vmatmul.bf16.gmra.mxu0 %v1077
        %v1091 = vpop.f32.mrf.mxu0
        %v1092 = vadd.f32 %v1063, %v1091
        %v1093 = vpop.f32.mrf.mxu0
        %v1094 = vadd.f32 %v1063, %v1093
        %1095 = vmatmul.bf16.gmra.mxu0 %v1080
        %v1096 = vpop.f32.mrf.mxu0
        %v1097 = vadd.f32 %v1063, %v1096
        %v1098 = vpop.f32.mrf.mxu0
        %v1099 = vadd.f32 %v1063, %v1098
        %1100 = vdwg.mxu0
        %v1101 = vmul.f32 %v1092, 0.5
        %v1102 = vmul.f32 %v1094, 0.5
        %v1103 = vmul.f32 %v1097, 0.5
        %v1104 = vmul.f32 %v1099, 0.5
        %v1105 = vmul.f32 %v1092, 0.70710677
        %v1106 = vmul.f32 %v1094, 0.70710677
        %v1107 = vmul.f32 %v1097, 0.70710677
        %v1108 = vmul.f32 %v1099, 0.70710677
        %v1109 = vand.u32 2147483647, %v1105
        %v1110 = vand.u32 2147483647, %v1106
        %v1111 = vand.u32 2147483647, %v1107
        %v1112 = vand.u32 2147483647, %v1108
        %v1113 = vmul.f32 %v1109, 0.3275911
        %v1114 = vmul.f32 %v1110, 0.3275911
        %v1115 = vmul.f32 %v1111, 0.3275911
        %v1116 = vmul.f32 %v1112, 0.3275911
        %v1117 = vadd.f32 %v1113, 1.0
        %v1118 = vadd.f32 %v1114, 1.0
        %v1119 = vadd.f32 %v1115, 1.0
        %v1120 = vadd.f32 %v1116, 1.0
        %v1121 = vrcp.pop %v1117
        %v1122 = vmul.f32 %v1117, %v1121
        %v1123 = vsub.f32 1.0, %v1122
        %v1124 = vmul.f32 %v1121, %v1123
        %v1125 = vadd.f32 %v1121, %v1124
        %vm1126 = vweird.f32 %v1117
        %vm1127 = vweird.f32 %v1121
        %vm1128 = vmor %vm1126, %vm1127
        %v1129 = vsel %vm1128, %v1121, %v1125
        %v1130 = vand.u32 2147483647, %v1117
        %vm1131 = vcmp.eq.f32.partialorder %v1130, 8.507059e+37
        %v1132 = vand.u32 %v1117, 2147483648
        %v1133 = vor.u32 1.1754944e-38, %v1132
        %v1134 = vsel %vm1131, %v1133, %v1129
        %v1135 = vmul.f32 1.0, %v1134
        %v1136 = vrcp.pop %v1118
        %v1137 = vmul.f32 %v1118, %v1136
        %v1138 = vsub.f32 1.0, %v1137
        %v1139 = vmul.f32 %v1136, %v1138
        %v1140 = vadd.f32 %v1136, %v1139
        %vm1141 = vweird.f32 %v1118
        %vm1142 = vweird.f32 %v1136
        %vm1143 = vmor %vm1141, %vm1142
        %v1144 = vsel %vm1143, %v1136, %v1140
        %v1145 = vand.u32 2147483647, %v1118
        %vm1146 = vcmp.eq.f32.partialorder %v1145, 8.507059e+37
        %v1147 = vand.u32 %v1118, 2147483648
        %v1148 = vor.u32 1.1754944e-38, %v1147
        %v1149 = vsel %vm1146, %v1148, %v1144
        %v1150 = vmul.f32 1.0, %v1149
        %v1151 = vrcp.pop %v1119
        %v1152 = vmul.f32 %v1119, %v1151
        %v1153 = vsub.f32 1.0, %v1152
        %v1154 = vmul.f32 %v1151, %v1153
        %v1155 = vadd.f32 %v1151, %v1154
        %vm1156 = vweird.f32 %v1119
        %vm1157 = vweird.f32 %v1151
        %vm1158 = vmor %vm1156, %vm1157
        %v1159 = vsel %vm1158, %v1151, %v1155
        %v1160 = vand.u32 2147483647, %v1119
        %vm1161 = vcmp.eq.f32.partialorder %v1160, 8.507059e+37
        %v1162 = vand.u32 %v1119, 2147483648
        %v1163 = vor.u32 1.1754944e-38, %v1162
        %v1164 = vsel %vm1161, %v1163, %v1159
        %v1165 = vmul.f32 1.0, %v1164
        %v1166 = vrcp.pop %v1120
        %v1167 = vmul.f32 %v1120, %v1166
        %v1168 = vsub.f32 1.0, %v1167
        %v1169 = vmul.f32 %v1166, %v1168
        %v1170 = vadd.f32 %v1166, %v1169
        %vm1171 = vweird.f32 %v1120
        %vm1172 = vweird.f32 %v1166
        %vm1173 = vmor %vm1171, %vm1172
        %v1174 = vsel %vm1173, %v1166, %v1170
        %v1175 = vand.u32 2147483647, %v1120
        %vm1176 = vcmp.eq.f32.partialorder %v1175, 8.507059e+37
        %v1177 = vand.u32 %v1120, 2147483648
        %v1178 = vor.u32 1.1754944e-38, %v1177
        %v1179 = vsel %vm1176, %v1178, %v1174
        %v1180 = vmul.f32 1.0, %v1179
        %v1181 = vmul.f32 %v1135, 1.0614054
        %v1182 = vmul.f32 %v1150, 1.0614054
        %v1183 = vmul.f32 %v1165, 1.0614054
        %v1184 = vmul.f32 %v1180, 1.0614054
        %v1185 = vadd.f32 %v1181, -1.4531521
        %v1186 = vadd.f32 %v1182, -1.4531521
        %v1187 = vadd.f32 %v1183, -1.4531521
        %v1188 = vadd.f32 %v1184, -1.4531521
        %v1189 = vmul.f32 %v1185, %v1135
        %v1190 = vmul.f32 %v1186, %v1150
        %v1191 = vmul.f32 %v1187, %v1165
        %v1192 = vmul.f32 %v1188, %v1180
        %v1193 = vadd.f32 %v1189, 1.4214138
        %v1194 = vadd.f32 %v1190, 1.4214138
        %v1195 = vadd.f32 %v1191, 1.4214138
        %v1196 = vadd.f32 %v1192, 1.4214138
        %v1197 = vmul.f32 %v1193, %v1135
        %v1198 = vmul.f32 %v1194, %v1150
        %v1199 = vmul.f32 %v1195, %v1165
        %v1200 = vmul.f32 %v1196, %v1180
        %v1201 = vadd.f32 %v1197, -0.28449672
        %v1202 = vadd.f32 %v1198, -0.28449672
        %v1203 = vadd.f32 %v1199, -0.28449672
        %v1204 = vadd.f32 %v1200, -0.28449672
        %v1205 = vmul.f32 %v1201, %v1135
        %v1206 = vmul.f32 %v1202, %v1150
        %v1207 = vmul.f32 %v1203, %v1165
        %v1208 = vmul.f32 %v1204, %v1180
        %v1209 = vadd.f32 %v1205, 0.2548296
        %v1210 = vadd.f32 %v1206, 0.2548296
        %v1211 = vadd.f32 %v1207, 0.2548296
        %v1212 = vadd.f32 %v1208, 0.2548296
        %v1213 = vmul.f32 %v1209, %v1135
        %v1214 = vmul.f32 %v1210, %v1150
        %v1215 = vmul.f32 %v1211, %v1165
        %v1216 = vmul.f32 %v1212, %v1180
        %v1217 = vsub.f32 0.0, %v1109
        %v1218 = vsub.f32 0.0, %v1110
        %v1219 = vsub.f32 0.0, %v1111
        %v1220 = vsub.f32 0.0, %v1112
        %v1221 = vmul.f32 %v1217, %v1109
        %v1222 = vmul.f32 %v1218, %v1110
        %v1223 = vmul.f32 %v1219, %v1111
        %v1224 = vmul.f32 %v1220, %v1112
        %v1225 = vmul.f32 %v1221, 1.442695
        %v1226 = vpow.pop %v1225
        %v1227 = vmul.f32 %v1222, 1.442695
        %v1228 = vpow.pop %v1227
        %v1229 = vmul.f32 %v1223, 1.442695
        %v1230 = vpow.pop %v1229
        %v1231 = vmul.f32 %v1224, 1.442695
        %v1232 = vpow.pop %v1231
        %v1233 = vmul.f32 %v1213, %v1226
        %v1234 = vmul.f32 %v1214, %v1228
        %v1235 = vmul.f32 %v1215, %v1230
        %v1236 = vmul.f32 %v1216, %v1232
        %v1237 = vsub.f32 1.0, %v1233
        %v1238 = vsub.f32 1.0, %v1234
        %v1239 = vsub.f32 1.0, %v1235
        %v1240 = vsub.f32 1.0, %v1236
        %vm1241 = vcmp.ge.f32.partialorder %v1105, 0.0
        %vm1242 = vcmp.ge.f32.partialorder %v1106, 0.0
        %vm1243 = vcmp.ge.f32.partialorder %v1107, 0.0
        %vm1244 = vcmp.ge.f32.partialorder %v1108, 0.0
        %v1245 = vsub.f32 0.0, %v1237
        %v1246 = vsub.f32 0.0, %v1238
        %v1247 = vsub.f32 0.0, %v1239
        %v1248 = vsub.f32 0.0, %v1240
        %v1249 = vsel %vm1241, %v1237, %v1245
        %v1250 = vsel %vm1242, %v1238, %v1246
        %v1251 = vsel %vm1243, %v1239, %v1247
        %v1252 = vsel %vm1244, %v1240, %v1248
        %v1253 = vadd.f32 %v1249, 1.0
        %v1254 = vadd.f32 %v1250, 1.0
        %v1255 = vadd.f32 %v1251, 1.0
        %v1256 = vadd.f32 %v1252, 1.0
        %v1257 = vmul.f32 %v1101, %v1253
        %v1258 = vmul.f32 %v1102, %v1254
        %v1259 = vmul.f32 %v1103, %v1255
        %v1260 = vmul.f32 %v1104, %v1256
        %v1261 = vpack.c.bf16 %v1258, %v1257
        %v1262 = vpack.c.bf16 %v1260, %v1259
        %v1263 = vld [vmem:[%s526] sm:$0xf]
        %v1264 = vld [vmem:[%s526 + $0x4] sm:$0xf]
        %v1265 = vld [vmem:[%s526 + $0x8] sm:$0xf]
        %v1266 = vld [vmem:[%s526 + $0xc] sm:$0xf]
        %v1267 = vld [vmem:[%s526 + $0x10] sm:$0xf]
        %v1268 = vld [vmem:[%s526 + $0x14] sm:$0xf]
        %v1269 = vld [vmem:[%s526 + $0x18] sm:$0xf]
        %v1270 = vld [vmem:[%s526 + $0x1c] sm:$0xf]
        %v1271 = vperm.slane %v558, 0
        %v1280 = vunpack.c.l.b16 %v1263
        %v1281 = vunpack.c.l.b16 %v1264
        %v1282 = vunpack.c.l.b16 %v1265
        %v1283 = vunpack.c.l.b16 %v1266
        %v1284 = vunpack.c.l.b16 %v1267
        %v1285 = vunpack.c.l.b16 %v1268
        %v1286 = vunpack.c.l.b16 %v1269
        %v1287 = vunpack.c.l.b16 %v1270
        %v1288 = vpack.c.b16 %v1281, %v1280
        %v1289 = vpack.c.b16 %v1283, %v1282
        %v1290 = vpack.c.b16 %v1285, %v1284
        %v1291 = vpack.c.b16 %v1287, %v1286
        %vm1296 = vcmask 523264
        %v1298 = vsel %vm1296, %v1261, 0
        %v1301 = vsel %vm1296, %v1262, 0
        %1303 = vmatpush.bf16.msra.mxu0 0
        %1304 = vmatpush.bf16.msra.mxu0 0
        %1305 = vmatpush.bf16.msra.mxu0 0
        %1306 = vmatpush.bf16.msra.mxu0 0
        %1307 = vmatpush.bf16.msra.mxu0 %v1291
        %1308 = vmatpush.bf16.msra.mxu0 %v1290
        %1309 = vmatpush.bf16.msra.mxu0 %v1289
        %1310 = vmatpush.bf16.msra.mxu0 %v1288
        %1311 = vmatmul.bf16.gmra.mxu0 %v1298
        %v1312 = vpop.f32.mrf.mxu0
        %v1313 = vadd.f32 %v1271, %v1312
        %v1314 = vpop.f32.mrf.mxu0
        %v1315 = vadd.f32 %v1271, %v1314
        %1316 = vmatmul.bf16.gmra.mxu0 %v1301
        %v1317 = vpop.f32.mrf.mxu0
        %v1318 = vadd.f32 %v1271, %v1317
        %v1319 = vpop.f32.mrf.mxu0
        %v1320 = vadd.f32 %v1271, %v1319
        %1321 = vdwg.mxu0
        %v1322 = vadd.f32 %v1313, %v955
        %v1323 = vadd.f32 %v1315, %v956
        %v1324 = vadd.f32 %v1318, %v957
        %v1325 = vadd.f32 %v1320, %v958
        %1326 = vst.msk [vmem:[#allocation2] sm:$0xff] %vm562, %v1322
        %1327 = vst.msk [vmem:[#allocation2 + $0x8] sm:$0xff] %vm562, %v1323
        %1328 = vst.msk [vmem:[#allocation2 + $0x10] sm:$0xff] %vm562, %v1324
        %1329 = vst.msk [vmem:[#allocation2 + $0x18] sm:$0xff] %vm562, %v1325
        %p1330 = scmp.eq.s32.totalorder %s29, 1
        // Predicated region
        $region73: #{mlp_mixer_forward.3} parent=67 // pred_check
          %p1331 = pneg %p1330
        $region74: #{mlp_mixer_forward.3} parent=67 // pred_check_branch
          %1333 = sbr.rel (%p1331) target = $region76
        $region75: #{mlp_mixer_forward.3} parent=67 // pred_region
          %v1334 = vld [vmem:[#allocation2] sm:$0xff]
          %v1335 = vld [vmem:[#allocation2 + $0x8] sm:$0xff]
          %v1336 = vld [vmem:[#allocation2 + $0x10] sm:$0xff]
          %v1337 = vld [vmem:[#allocation2 + $0x18] sm:$0xff]
          %v1338 = vld [vmem:[%s7] sm:$0x1]
          %v1339 = vld [vmem:[%s8] sm:$0x1]
          %v1340 = vsel %vm562, %v1334, 0.0
          %1341 = vadd.xlane.f32.xlu0 %v1340
          %v1342 = vpop.xlane.xlu0 %1341
          %v1343 = vsel %vm562, %v1335, 0.0
          %1344 = vadd.xlane.f32.xlu0 %v1343
          %v1345 = vpop.xlane.xlu0 %1344
          %v1346 = vsel %vm562, %v1336, 0.0
          %1347 = vadd.xlane.f32.xlu0 %v1346
          %v1348 = vpop.xlane.xlu0 %1347
          %v1349 = vsel %vm562, %v1337, 0.0
          %1350 = vadd.xlane.f32.xlu0 %v1349
          %v1351 = vpop.xlane.xlu0 %1350
          %v1352 = vmul.f32 %v1342, %v581
          %v1353 = vmul.f32 %v1345, %v581
          %v1354 = vmul.f32 %v1348, %v581
          %v1355 = vmul.f32 %v1351, %v581
          %v1356 = vsub.f32 %v1334, %v1352
          %v1357 = vsub.f32 %v1335, %v1353
          %v1358 = vsub.f32 %v1336, %v1354
          %v1359 = vsub.f32 %v1337, %v1355
          %v1360 = vmul.f32 %v1356, %v1356
          %v1361 = vmul.f32 %v1357, %v1357
          %v1362 = vmul.f32 %v1358, %v1358
          %v1363 = vmul.f32 %v1359, %v1359
          %v1364 = vsel %vm562, %v1360, 0.0
          %1365 = vadd.xlane.f32.xlu0 %v1364
          %v1366 = vpop.xlane.xlu0 %1365
          %v1367 = vsel %vm562, %v1361, 0.0
          %1368 = vadd.xlane.f32.xlu0 %v1367
          %v1369 = vpop.xlane.xlu0 %1368
          %v1370 = vsel %vm562, %v1362, 0.0
          %1371 = vadd.xlane.f32.xlu0 %v1370
          %v1372 = vpop.xlane.xlu0 %1371
          %v1373 = vsel %vm562, %v1363, 0.0
          %1374 = vadd.xlane.f32.xlu0 %v1373
          %v1375 = vpop.xlane.xlu0 %1374
          %v1376 = vmul.f32 %v1366, %v581
          %v1377 = vmul.f32 %v1369, %v581
          %v1378 = vmul.f32 %v1372, %v581
          %v1379 = vmul.f32 %v1375, %v581
          %v1380 = vadd.f32 %v1376, 1e-05
          %v1381 = vadd.f32 %v1377, 1e-05
          %v1382 = vadd.f32 %v1378, 1e-05
          %v1383 = vadd.f32 %v1379, 1e-05
          %v1384 = vrsqrt.pop %v1380
          %v1385 = vmul.f32 %v1384, %v1380
          %v1386 = vmul.f32 %v1385, %v1384
          %v1387 = vmul.f32 0.5, %v1386
          %v1388 = vsub.f32 1.5, %v1387
          %v1389 = vmul.f32 %v1384, %v1388
          %vm1390 = vweird.f32 %v1380
          %vm1391 = vweird.f32 %v1384
          %vm1392 = vmor %vm1390, %vm1391
          %v1393 = vsel %vm1392, %v1384, %v1389
          %v1394 = vrsqrt.pop %v1381
          %v1395 = vmul.f32 %v1394, %v1381
          %v1396 = vmul.f32 %v1395, %v1394
          %v1397 = vmul.f32 0.5, %v1396
          %v1398 = vsub.f32 1.5, %v1397
          %v1399 = vmul.f32 %v1394, %v1398
          %vm1400 = vweird.f32 %v1381
          %vm1401 = vweird.f32 %v1394
          %vm1402 = vmor %vm1400, %vm1401
          %v1403 = vsel %vm1402, %v1394, %v1399
          %v1404 = vrsqrt.pop %v1382
          %v1405 = vmul.f32 %v1404, %v1382
          %v1406 = vmul.f32 %v1405, %v1404
          %v1407 = vmul.f32 0.5, %v1406
          %v1408 = vsub.f32 1.5, %v1407
          %v1409 = vmul.f32 %v1404, %v1408
          %vm1410 = vweird.f32 %v1382
          %vm1411 = vweird.f32 %v1404
          %vm1412 = vmor %vm1410, %vm1411
          %v1413 = vsel %vm1412, %v1404, %v1409
          %v1414 = vrsqrt.pop %v1383
          %v1415 = vmul.f32 %v1414, %v1383
          %v1416 = vmul.f32 %v1415, %v1414
          %v1417 = vmul.f32 0.5, %v1416
          %v1418 = vsub.f32 1.5, %v1417
          %v1419 = vmul.f32 %v1414, %v1418
          %vm1420 = vweird.f32 %v1383
          %vm1421 = vweird.f32 %v1414
          %vm1422 = vmor %vm1420, %vm1421
          %v1423 = vsel %vm1422, %v1414, %v1419
          %v1424 = vmul.f32 %v1356, %v1393
          %v1425 = vmul.f32 %v1357, %v1403
          %v1426 = vmul.f32 %v1358, %v1413
          %v1427 = vmul.f32 %v1359, %v1423
          %v1429 = vperm.slane %v1338, 0
          %v1431 = vmul.f32 %v1424, %v1429
          %v1432 = vmul.f32 %v1425, %v1429
          %v1433 = vmul.f32 %v1426, %v1429
          %v1434 = vmul.f32 %v1427, %v1429
          %v1436 = vperm.slane %v1339, 0
          %v1438 = vadd.f32 %v1431, %v1436
          %v1439 = vadd.f32 %v1432, %v1436
          %v1440 = vadd.f32 %v1433, %v1436
          %v1441 = vadd.f32 %v1434, %v1436
          %v1442 = vld [vmem:[%s9] sm:$0x3]
          %v1444 = vsel %vm562, %v1442, 0
          %1446 = vmatpush.msra.mxu0 0.0
          %1447 = vmatpush.msra.mxu0 0.0
          %1448 = vmatpush.msra.mxu0 0.0
          %1449 = vmatpush.msra.mxu0 0.0
          %1450 = vmatpush.msra.mxu0 0.0
          %1451 = vmatpush.msra.mxu0 0.0
          %1452 = vmatpush.msra.mxu0 0.0
          %1453 = vmatpush.msra.mxu0 0.0
          %1454 = vmatpush.msra.mxu0 0.0
          %1455 = vmatpush.msra.mxu0 0.0
          %1456 = vmatpush.msra.mxu0 0.0
          %1457 = vmatpush.msra.mxu0 0.0
          %1458 = vmatpush.msra.mxu0 %v1441
          %1459 = vmatpush.msra.mxu0 %v1440
          %1460 = vmatpush.msra.mxu0 %v1439
          %1461 = vmatpush.msra.mxu0 %v1438
          %1462 = vmatmul.f32.gmra.mxu0 %v1444
          %v1463 = vpop.f32.mrf.mxu0
          %v1464 = vadd.f32 0.0, %v1463
          %1465 = vdwg.mxu0
          %v1466 = vpack.c.bf16 %v1464, %v1464
          %v1467 = vld [vmem:[%s10] sm:$0xf]
          %v1468 = vld [vmem:[%s10 + $0x4] sm:$0xf]
          %v1469 = vld [vmem:[%s10 + $0x8] sm:$0xf]
          %v1470 = vld [vmem:[%s10 + $0xc] sm:$0xf]
          %v1471 = vld [vmem:[%s11] sm:$0x1]
          %v1473 = vperm.slane %v1471, 0
          %v1479 = vunpack.c.l.b16 %v1467
          %v1480 = vunpack.c.l.b16 %v1468
          %v1481 = vunpack.c.l.b16 %v1469
          %v1482 = vunpack.c.l.b16 %v1470
          %v1483 = vpack.c.b16 %v1480, %v1479
          %v1484 = vpack.c.b16 %v1482, %v1481
          %v1488 = vsel %vm562, %v1466, 0
          %1490 = vmatpush.bf16.msra.mxu0 0
          %1491 = vmatpush.bf16.msra.mxu0 0
          %1492 = vmatpush.bf16.msra.mxu0 0
          %1493 = vmatpush.bf16.msra.mxu0 0
          %1494 = vmatpush.bf16.msra.mxu0 0
          %1495 = vmatpush.bf16.msra.mxu0 0
          %1496 = vmatpush.bf16.msra.mxu0 %v1484
          %1497 = vmatpush.bf16.msra.mxu0 %v1483
          %1498 = vmatmul.bf16.gmra.mxu0 %v1488
          %v1499 = vpop.f32.mrf.mxu0
          %v1500 = vadd.f32 %v1473, %v1499
          %v1501 = vpop.f32.mrf.mxu0
          %1502 = vdwg.mxu0
          %1503 = vst [vmem:[#allocation3] sm:$0x3] %v1500
        $region76: #{mlp_mixer_forward.3} parent=67 // pred_fallthru
          _
        // Predicated region
        $region77: #{mlp_mixer_forward.3} parent=67 // pred_check
          %p1504 = pneg %p341
        $region78: #{mlp_mixer_forward.3} parent=67 // pred_check_branch
          %1506 = sbr.rel (%p1504) target = $region80
        $region79: #{mlp_mixer_forward.3} parent=67 // pred_region
          %1508 = vsyncadd [#allocation4], 0
          %s1509 = smul.addr %s28, 2
          %s1510 = scalar_lea.hbm %s12, %s1509
          %s1512 = sshll.u32 [#allocation3], 4
          %s1513 = int_to_ptr.vmem [resolvable:$true] %s1512
          %s1514 = sshll.u32 %s1510, 4
          %s1515 = int_to_ptr.hbm [resolvable:$true] %s1514
          %1517 = dma.vmem_to_hbm [thread:$0]  %s1513, 32, %s1515, [#allocation4]
        $region80: #{mlp_mixer_forward.3} parent=67 // pred_fallthru
          _
        // Predicated region
        $region81: #{mlp_mixer_forward.3} parent=67 // pred_check
          %p1518 = pneg %p341
        $region82: #{mlp_mixer_forward.3} parent=67 // pred_check_branch
          %1520 = sbr.rel (%p1518) target = $region84
        $region83: #{mlp_mixer_forward.3} parent=67 // pred_region
          %1522 = dma.done [#allocation4], 32
        $region84: #{mlp_mixer_forward.3} parent=67 // pred_fallthru
          _
      $region68: #{mlp_mixer_forward.3} parent=5 // pred_fallthru
        _
      %p1523 = scmp.le.s32.totalorder 2, %s19
      // Predicated region
      $region85: #{mlp_mixer_forward.3} parent=5 // pred_check
        %p1524 = pneg %p1523
      $region86: #{mlp_mixer_forward.3} parent=5 // pred_check_branch
        %1526 = sbr.rel (%p1524) target = $region88
      $region87: #{mlp_mixer_forward.3} parent=5 // pred_region
        %s1527 = ssub.s32 %s19, 2
      $region88: #{mlp_mixer_forward.3} parent=5 // pred_fallthru
        _
    $region6: #{mlp_mixer_forward.3} parent=1 // loop_footer
      %s23 = sadd.s32 1, %s19
    $region7: #{mlp_mixer_forward.3} parent=1 // loop_footer_branch
      %18 = sbr.rel target = $region3
    $region8: #{mlp_mixer_forward.3} parent=1 // loop_exit
      _
    %1528 = vsyncpa [#allocation4], 1
    %s1529 = scalar_lea.sflag [#allocation4], 1
    %1530 = vsyncpa %s1529, 1

</llo_original>
